<compile_context>
chip_gen: v7x
topology: tpu7x:2x2x1
jax: 0.10.0
libtpu: 0.0.40
codegen_flags: <defaults>
</compile_context>

<pallas_src>
import math
import jax
import jax.numpy as jnp
from jax import lax
from jax.experimental import pallas as pl
from jax.experimental.pallas import tpu as pltpu

# -------------------- model config (small, synthetic) --------------------
B = 2          # batch
S = 8          # sequence length
D = 32         # d_model (hidden)
H = 4          # n_head
HD = D // H    # head dim
M = 64         # d_mlp
LN_EPS = 1e-5

# Row layout of the packed small-parameter array ([8, 128], one VMEM tile).
_R_LN1_G, _R_LN1_B, _R_BO, _R_LN2_G, _R_LN2_B, _R_BPR, _R_BQKV, _R_BFC = range(8)


# ------------------------------ Pallas kernel -----------------------------
def residual_attn_block_kernel(
    x_ref,                       # [B, S, D]
    wqkv_ref,                    # [D, 3D]  (fused q|k|v, in x out)
    wo_ref,                      # [D, D]   (attention output proj)
    wfc_ref,                     # [D, M]
    wpr_ref,                     # [M, D]
    small_ref,                   # [8, 128] packed LN params + biases
    o_ref,                       # [B, S, D]
):
    f32 = jnp.float32

    # Static slices of the packed small-parameter tile (free).
    ln1_g = small_ref[_R_LN1_G:_R_LN1_G + 1, 0:D]
    ln1_b = small_ref[_R_LN1_B:_R_LN1_B + 1, 0:D]
    bo    = small_ref[_R_BO:_R_BO + 1,       0:D]
    ln2_g = small_ref[_R_LN2_G:_R_LN2_G + 1, 0:D]
    ln2_b = small_ref[_R_LN2_B:_R_LN2_B + 1, 0:D]
    bpr   = small_ref[_R_BPR:_R_BPR + 1,     0:D]
    bqkv  = small_ref[_R_BQKV:_R_BQKV + 1,   0:3 * D]
    bfc   = small_ref[_R_BFC:_R_BFC + 1,     0:M]

    # Collapse (B, S) into rows: all projections become 2-D matmuls.
    x2d = x_ref[...].astype(f32).reshape(B * S, D)        # [BS, D]

    def layernorm(h, g, b):
        mu = jnp.mean(h, axis=-1, keepdims=True)
        var = jnp.mean((h - mu) ** 2, axis=-1, keepdims=True)   # biased, like torch
        return (h - mu) * lax.rsqrt(var + LN_EPS) * g + b

    # ---------------- attention branch ----------------
    h1 = layernorm(x2d, ln1_g, ln1_b)                      # [BS, D]

    # Fused q/k/v projection: one 2-D matmul + one bias add.
    qkv = jnp.dot(h1, wqkv_ref[...], preferred_element_type=f32) + bqkv  # [BS, 3D]
    qkv = qkv.reshape(B, S, 3 * D)                         # free (leading-dim split)

    scale = 1.0 / math.sqrt(HD)
    ctx_heads = []
    for hh in range(H):                                    # H=4, unrolled at trace time
        lo = hh * HD
        q_h = qkv[:, :, lo:lo + HD] * scale                # [B, S, HD]
        k_h = qkv[:, :, D + lo:D + lo + HD]
        v_h = qkv[:, :, 2 * D + lo:2 * D + lo + HD]
        s = jnp.einsum('bqd,bkd->bqk', q_h, k_h,
                       preferred_element_type=f32)         # [B, S, S]
        s = s - jnp.max(s, axis=-1, keepdims=True)
        p = jnp.exp(s)
        p = p * pl.reciprocal(jnp.sum(p, axis=-1, keepdims=True), approx=True)
        ctx_heads.append(jnp.einsum('bqk,bkd->bqd', p, v_h,
                                    preferred_element_type=f32))  # [B, S, HD]
    ctx = jnp.concatenate(ctx_heads, axis=-1)              # [B, S, D]
    ctx2d = ctx.reshape(B * S, D)                          # free (leading-dim merge)

    attn = jnp.dot(ctx2d, wo_ref[...], preferred_element_type=f32) + bo
    x1 = x2d + attn                                        # residual 1   [BS, D]

    # ---------------- MLP branch ----------------
    h2 = layernorm(x1, ln2_g, ln2_b)
    m = jnp.dot(h2, wfc_ref[...], preferred_element_type=f32) + bfc      # [BS, M]
    m = 0.5 * m * (1.0 + lax.erf(m / math.sqrt(2.0)))      # exact nn.GELU()
    m = jnp.dot(m, wpr_ref[...], preferred_element_type=f32) + bpr       # [BS, D]

    o_ref[...] = (x1 + m).reshape(B, S, D).astype(o_ref.dtype)           # residual 2


# ------------------------------ wrapper -----------------------------------
def residual_attention_block(x, params):
    (ln1_g, ln1_b, wq, bq, wk, bk, wv, bv, wo, bo,
     ln2_g, ln2_b, wfc, bfc, wpr, bpr) = params

    # Fuse the three projection weights/biases at trace time (outside kernel).
    wqkv = jnp.concatenate([wq, wk, wv], axis=1)           # [D, 3D]
    bqkv = jnp.concatenate([bq, bk, bv], axis=1)           # [1, 3D]

    # Pack the 8 tiny parameter tensors into one [8, 128] f32 tile (one DMA).
    def row(v):
        v = v.reshape(1, -1).astype(jnp.float32)
        return jnp.pad(v, ((0, 0), (0, 128 - v.shape[1])))

    small = jnp.concatenate(
        [row(ln1_g), row(ln1_b), row(bo), row(ln2_g),
         row(ln2_b), row(bpr), row(bqkv), row(bfc)], axis=0)   # [8, 128]

    kernel_args = (x, wqkv, wo, wfc, wpr, small)
    vmem = pl.BlockSpec(memory_space=pltpu.MemorySpace.VMEM)

    # Single invocation (no grid): whole block + all weights (~40 KiB) live in
    # VMEM; avoids per-grid-step overhead and weight re-buffering.
    return pl.pallas_call(
        residual_attn_block_kernel,
        out_shape=jax.ShapeDtypeStruct((B, S, D), x.dtype),
        in_specs=[vmem] * len(kernel_args),
        out_specs=vmem,
    )(*kernel_args)


# --------------------------- reference (plain JAX) -------------------------
def reference(x, params):
    (ln1_g, ln1_b, wq, bq, wk, bk, wv, bv, wo, bo,
     ln2_g, ln2_b, wfc, bfc, wpr, bpr) = params

    def ln(h, g, b):
        mu = jnp.mean(h, axis=-1, keepdims=True)
        var = jnp.mean((h - mu) ** 2, axis=-1, keepdims=True)
        return (h - mu) / jnp.sqrt(var + LN_EPS) * g + b

    h = ln(x, ln1_g, ln1_b)
    q = h @ wq + bq
    k = h @ wk + bk
    v = h @ wv + bv
    qh = q.reshape(B, S, H, HD).transpose(0, 2, 1, 3)
    kh = k.reshape(B, S, H, HD).transpose(0, 2, 1, 3)
    vh = v.reshape(B, S, H, HD).transpose(0, 2, 1, 3)
    s = jnp.einsum("bhqd,bhkd->bhqk", qh, kh) / math.sqrt(HD)
    p = jax.nn.softmax(s, axis=-1)
    ctx = jnp.einsum("bhqk,bhkd->bhqd", p, vh).transpose(0, 2, 1, 3).reshape(B, S, D)
    x1 = x + (ctx @ wo + bo)
    h2 = ln(x1, ln2_g, ln2_b)
    m = h2 @ wfc + bfc
    m = 0.5 * m * (1.0 + lax.erf(m / math.sqrt(2.0)))
    m = m @ wpr + bpr
    return x1 + m


# ------------------------------ main ---------------------------------------
if __name__ == "__main__":
    key = jax.random.PRNGKey(0)
    ks = jax.random.split(key, 16)

    # PyTorch nn.Linear stores W as [out, in] and computes x @ W.T + b.
    # We initialize W_pt ([out, in]) deterministically and pass W_pt.T ([in, out]).
    def linear(kw, kb, d_in, d_out):
        w_pt = jax.random.normal(kw, (d_out, d_in), jnp.float32) * 0.02
        b = jax.random.normal(kb, (1, d_out), jnp.float32) * 0.02
        return w_pt.T, b

    wq, bq = linear(ks[0], ks[1], D, D)
    wk, bk = linear(ks[2], ks[3], D, D)
    wv, bv = linear(ks[4], ks[5], D, D)
    wo, bo = linear(ks[6], ks[7], D, D)      # self.proj
    wfc, bfc = linear(ks[8], ks[9], D, M)    # mlp.c_fc
    wpr, bpr = linear(ks[10], ks[11], M, D)  # mlp.c_proj

    # LayerNorm params (nn.LayerNorm default init: gamma=1, beta=0; perturb a bit).
    ln1_g = jnp.ones((1, D), jnp.float32) + 0.01 * jax.random.normal(ks[12], (1, D))
    ln1_b = 0.01 * jax.random.normal(ks[13], (1, D), jnp.float32)
    ln2_g = jnp.ones((1, D), jnp.float32) + 0.01 * jax.random.normal(ks[14], (1, D))
    ln2_b = 0.01 * jax.random.normal(ks[15], (1, D), jnp.float32)

    params = (ln1_g, ln1_b, wq, bq, wk, bk, wv, bv, wo, bo,
              ln2_g, ln2_b, wfc, bfc, wpr, bpr)

    x = jax.random.normal(jax.random.PRNGKey(42), (B, S, D), jnp.float32)

    out = jax.block_until_ready(residual_attention_block(x, params))
    ref = reference(x, params)

    assert out.shape == (B, S, D)
    max_err = float(jnp.max(jnp.abs(out - ref)))
    # Tolerance slightly widened vs 1e-4 to cover the approx (EUP) softmax
    # reciprocal; real bugs produce O(0.1-1) errors, so this still validates.
    assert jnp.allclose(out, ref, atol=2e-4, rtol=2e-4), max_err

    print("KERNEL_OK")
</pallas_src>

<mosaic_0001>
module attributes {stable_mosaic.version = 11 : i64} {
  func.func @residual_attn_block_kernel(%arg0: memref<2x8x32xf32, #tpu.memory_space<vmem>>, %arg1: memref<32x96xf32, #tpu.memory_space<vmem>>, %arg2: memref<32x32xf32, #tpu.memory_space<vmem>>, %arg3: memref<32x64xf32, #tpu.memory_space<vmem>>, %arg4: memref<64x32xf32, #tpu.memory_space<vmem>>, %arg5: memref<8x128xf32, #tpu.memory_space<vmem>>, %arg6: memref<2x8x32xf32, #tpu.memory_space<vmem>>) attributes {dimension_semantics = [], scalar_prefetch = 0 : i64, scratch_operands = 0 : i64, tpu.core_type = #tpu.core_type<tc>} {
    %c0 = arith.constant 0 : index
    %c0_0 = arith.constant 0 : index
    %0 = vector.load %arg5[%c0, %c0_0] : memref<8x128xf32, #tpu.memory_space<vmem>>, vector<1x32xf32>
    %c1 = arith.constant 1 : index
    %c0_1 = arith.constant 0 : index
    %1 = vector.load %arg5[%c1, %c0_1] : memref<8x128xf32, #tpu.memory_space<vmem>>, vector<1x32xf32>
    %c2 = arith.constant 2 : index
    %c0_2 = arith.constant 0 : index
    %2 = vector.load %arg5[%c2, %c0_2] : memref<8x128xf32, #tpu.memory_space<vmem>>, vector<1x32xf32>
    %c3 = arith.constant 3 : index
    %c0_3 = arith.constant 0 : index
    %3 = vector.load %arg5[%c3, %c0_3] : memref<8x128xf32, #tpu.memory_space<vmem>>, vector<1x32xf32>
    %c4 = arith.constant 4 : index
    %c0_4 = arith.constant 0 : index
    %4 = vector.load %arg5[%c4, %c0_4] : memref<8x128xf32, #tpu.memory_space<vmem>>, vector<1x32xf32>
    %c5 = arith.constant 5 : index
    %c0_5 = arith.constant 0 : index
    %5 = vector.load %arg5[%c5, %c0_5] : memref<8x128xf32, #tpu.memory_space<vmem>>, vector<1x32xf32>
    %c6 = arith.constant 6 : index
    %c0_6 = arith.constant 0 : index
    %6 = vector.load %arg5[%c6, %c0_6] : memref<8x128xf32, #tpu.memory_space<vmem>>, vector<1x96xf32>
    %c7 = arith.constant 7 : index
    %c0_7 = arith.constant 0 : index
    %7 = vector.load %arg5[%c7, %c0_7] : memref<8x128xf32, #tpu.memory_space<vmem>>, vector<1x64xf32>
    %c0_8 = arith.constant 0 : index
    %c0_9 = arith.constant 0 : index
    %c0_10 = arith.constant 0 : index
    %8 = vector.load %arg0[%c0_8, %c0_9, %c0_10] : memref<2x8x32xf32, #tpu.memory_space<vmem>>, vector<2x8x32xf32>
    %9 = vector.shape_cast %8 : vector<2x8x32xf32> to vector<16x32xf32>
    %cst = arith.constant dense<0.000000e+00> : vector<16xf32>
    %10 = vector.multi_reduction <add>, %9, %cst [1] : vector<16x32xf32> to vector<16xf32>
    %11 = vector.shape_cast %10 : vector<16xf32> to vector<16x1xf32>
    %cst_11 = arith.constant 3.200000e+01 : f32
    %12 = vector.broadcast %cst_11 : f32 to vector<16x1xf32>
    %13 = arith.divf %11, %12 : vector<16x1xf32>
    %14 = vector.broadcast %13 : vector<16x1xf32> to vector<16x32xf32>
    %15 = arith.subf %9, %14 : vector<16x32xf32>
    %16 = arith.mulf %15, %15 : vector<16x32xf32>
    %cst_12 = arith.constant dense<0.000000e+00> : vector<16xf32>
    %17 = vector.multi_reduction <add>, %16, %cst_12 [1] : vector<16x32xf32> to vector<16xf32>
    %18 = vector.shape_cast %17 : vector<16xf32> to vector<16x1xf32>
    %cst_13 = arith.constant 3.200000e+01 : f32
    %19 = vector.broadcast %cst_13 : f32 to vector<16x1xf32>
    %20 = arith.divf %18, %19 : vector<16x1xf32>
    %21 = vector.broadcast %13 : vector<16x1xf32> to vector<16x32xf32>
    %22 = arith.subf %9, %21 : vector<16x32xf32>
    %cst_14 = arith.constant 9.99999974E-6 : f32
    %23 = vector.broadcast %cst_14 : f32 to vector<16x1xf32>
    %24 = arith.addf %20, %23 : vector<16x1xf32>
    %25 = math.rsqrt %24 : vector<16x1xf32>
    %26 = vector.broadcast %25 : vector<16x1xf32> to vector<16x32xf32>
    %27 = arith.mulf %22, %26 : vector<16x32xf32>
    %28 = vector.broadcast %0 : vector<1x32xf32> to vector<16x32xf32>
    %29 = arith.mulf %27, %28 : vector<16x32xf32>
    %30 = vector.broadcast %1 : vector<1x32xf32> to vector<16x32xf32>
    %31 = arith.addf %29, %30 : vector<16x32xf32>
    %c0_15 = arith.constant 0 : index
    %c0_16 = arith.constant 0 : index
    %32 = vector.load %arg1[%c0_15, %c0_16] : memref<32x96xf32, #tpu.memory_space<vmem>>, vector<32x96xf32>
    %cst_17 = arith.constant dense<0.000000e+00> : vector<16x96xf32>
    %33 = tpu.matmul %31, %32, %cst_17 {dimension_numbers = #tpu.dot_dimension_numbers<[1], [0], [0], [1], [0, 0, 1, 1], [], []>} : vector<16x32xf32>, vector<32x96xf32>, vector<16x96xf32> -> vector<16x96xf32>
    %34 = vector.broadcast %6 : vector<1x96xf32> to vector<16x96xf32>
    %35 = arith.addf %33, %34 : vector<16x96xf32>
    %36 = vector.shape_cast %35 : vector<16x96xf32> to vector<2x8x96xf32>
    %37 = vector.extract_strided_slice %36 {offsets = [0, 0, 0], sizes = [2, 8, 8], strides = [1, 1, 1]} : vector<2x8x96xf32> to vector<2x8x8xf32>
    %cst_18 = arith.constant 0.353553385 : f32
    %38 = vector.broadcast %cst_18 : f32 to vector<2x8x8xf32>
    %39 = arith.mulf %37, %38 : vector<2x8x8xf32>
    %40 = vector.extract_strided_slice %36 {offsets = [0, 0, 32], sizes = [2, 8, 8], strides = [1, 1, 1]} : vector<2x8x96xf32> to vector<2x8x8xf32>
    %41 = vector.extract_strided_slice %36 {offsets = [0, 0, 64], sizes = [2, 8, 8], strides = [1, 1, 1]} : vector<2x8x96xf32> to vector<2x8x8xf32>
    "tpu.trace_start"() <{level = 10 : i32, message = "bqd,bkd->bqk"}> : () -> ()
    %cst_19 = arith.constant dense<0.000000e+00> : vector<2x8x8xf32>
    %42 = tpu.matmul %39, %40, %cst_19 {dimension_numbers = #tpu.dot_dimension_numbers<[2], [2], [1], [1], [0, 0, 0, 1, 1, 1], [0], [0]>} : vector<2x8x8xf32>, vector<2x8x8xf32>, vector<2x8x8xf32> -> vector<2x8x8xf32>
    "tpu.trace_stop"() : () -> ()
    %cst_20 = arith.constant dense<0xFF800000> : vector<2x8xf32>
    %43 = vector.multi_reduction <maximumf>, %42, %cst_20 [2] : vector<2x8x8xf32> to vector<2x8xf32>
    %44 = vector.shape_cast %43 : vector<2x8xf32> to vector<2x8x1xf32>
    %45 = vector.broadcast %44 : vector<2x8x1xf32> to vector<2x8x8xf32>
    %46 = arith.subf %42, %45 : vector<2x8x8xf32>
    %47 = math.exp %46 : vector<2x8x8xf32>
    %cst_21 = arith.constant dense<0.000000e+00> : vector<2x8xf32>
    %48 = vector.multi_reduction <add>, %47, %cst_21 [2] : vector<2x8x8xf32> to vector<2x8xf32>
    %49 = vector.shape_cast %48 : vector<2x8xf32> to vector<2x8x1xf32>
    %50 = tpu.reciprocal %49 {approx = true} : vector<2x8x1xf32> -> vector<2x8x1xf32>
    %51 = vector.broadcast %50 : vector<2x8x1xf32> to vector<2x8x8xf32>
    %52 = arith.mulf %47, %51 : vector<2x8x8xf32>
    "tpu.trace_start"() <{level = 10 : i32, message = "bqk,bkd->bqd"}> : () -> ()
    %cst_22 = arith.constant dense<0.000000e+00> : vector<2x8x8xf32>
    %53 = tpu.matmul %52, %41, %cst_22 {dimension_numbers = #tpu.dot_dimension_numbers<[2], [1], [1], [2], [0, 0, 0, 1, 1, 2], [0], [0]>} : vector<2x8x8xf32>, vector<2x8x8xf32>, vector<2x8x8xf32> -> vector<2x8x8xf32>
    "tpu.trace_stop"() : () -> ()
    %54 = vector.extract_strided_slice %36 {offsets = [0, 0, 8], sizes = [2, 8, 8], strides = [1, 1, 1]} : vector<2x8x96xf32> to vector<2x8x8xf32>
    %cst_23 = arith.constant 0.353553385 : f32
    %55 = vector.broadcast %cst_23 : f32 to vector<2x8x8xf32>
    %56 = arith.mulf %54, %55 : vector<2x8x8xf32>
    %57 = vector.extract_strided_slice %36 {offsets = [0, 0, 40], sizes = [2, 8, 8], strides = [1, 1, 1]} : vector<2x8x96xf32> to vector<2x8x8xf32>
    %58 = vector.extract_strided_slice %36 {offsets = [0, 0, 72], sizes = [2, 8, 8], strides = [1, 1, 1]} : vector<2x8x96xf32> to vector<2x8x8xf32>
    "tpu.trace_start"() <{level = 10 : i32, message = "bqd,bkd->bqk"}> : () -> ()
    %cst_24 = arith.constant dense<0.000000e+00> : vector<2x8x8xf32>
    %59 = tpu.matmul %56, %57, %cst_24 {dimension_numbers = #tpu.dot_dimension_numbers<[2], [2], [1], [1], [0, 0, 0, 1, 1, 1], [0], [0]>} : vector<2x8x8xf32>, vector<2x8x8xf32>, vector<2x8x8xf32> -> vector<2x8x8xf32>
    "tpu.trace_stop"() : () -> ()
    %cst_25 = arith.constant dense<0xFF800000> : vector<2x8xf32>
    %60 = vector.multi_reduction <maximumf>, %59, %cst_25 [2] : vector<2x8x8xf32> to vector<2x8xf32>
    %61 = vector.shape_cast %60 : vector<2x8xf32> to vector<2x8x1xf32>
    %62 = vector.broadcast %61 : vector<2x8x1xf32> to vector<2x8x8xf32>
    %63 = arith.subf %59, %62 : vector<2x8x8xf32>
    %64 = math.exp %63 : vector<2x8x8xf32>
    %cst_26 = arith.constant dense<0.000000e+00> : vector<2x8xf32>
    %65 = vector.multi_reduction <add>, %64, %cst_26 [2] : vector<2x8x8xf32> to vector<2x8xf32>
    %66 = vector.shape_cast %65 : vector<2x8xf32> to vector<2x8x1xf32>
    %67 = tpu.reciprocal %66 {approx = true} : vector<2x8x1xf32> -> vector<2x8x1xf32>
    %68 = vector.broadcast %67 : vector<2x8x1xf32> to vector<2x8x8xf32>
    %69 = arith.mulf %64, %68 : vector<2x8x8xf32>
    "tpu.trace_start"() <{level = 10 : i32, message = "bqk,bkd->bqd"}> : () -> ()
    %cst_27 = arith.constant dense<0.000000e+00> : vector<2x8x8xf32>
    %70 = tpu.matmul %69, %58, %cst_27 {dimension_numbers = #tpu.dot_dimension_numbers<[2], [1], [1], [2], [0, 0, 0, 1, 1, 2], [0], [0]>} : vector<2x8x8xf32>, vector<2x8x8xf32>, vector<2x8x8xf32> -> vector<2x8x8xf32>
    "tpu.trace_stop"() : () -> ()
    %71 = vector.extract_strided_slice %36 {offsets = [0, 0, 16], sizes = [2, 8, 8], strides = [1, 1, 1]} : vector<2x8x96xf32> to vector<2x8x8xf32>
    %cst_28 = arith.constant 0.353553385 : f32
    %72 = vector.broadcast %cst_28 : f32 to vector<2x8x8xf32>
    %73 = arith.mulf %71, %72 : vector<2x8x8xf32>
    %74 = vector.extract_strided_slice %36 {offsets = [0, 0, 48], sizes = [2, 8, 8], strides = [1, 1, 1]} : vector<2x8x96xf32> to vector<2x8x8xf32>
    %75 = vector.extract_strided_slice %36 {offsets = [0, 0, 80], sizes = [2, 8, 8], strides = [1, 1, 1]} : vector<2x8x96xf32> to vector<2x8x8xf32>
    "tpu.trace_start"() <{level = 10 : i32, message = "bqd,bkd->bqk"}> : () -> ()
    %cst_29 = arith.constant dense<0.000000e+00> : vector<2x8x8xf32>
    %76 = tpu.matmul %73, %74, %cst_29 {dimension_numbers = #tpu.dot_dimension_numbers<[2], [2], [1], [1], [0, 0, 0, 1, 1, 1], [0], [0]>} : vector<2x8x8xf32>, vector<2x8x8xf32>, vector<2x8x8xf32> -> vector<2x8x8xf32>
    "tpu.trace_stop"() : () -> ()
    %cst_30 = arith.constant dense<0xFF800000> : vector<2x8xf32>
    %77 = vector.multi_reduction <maximumf>, %76, %cst_30 [2] : vector<2x8x8xf32> to vector<2x8xf32>
    %78 = vector.shape_cast %77 : vector<2x8xf32> to vector<2x8x1xf32>
    %79 = vector.broadcast %78 : vector<2x8x1xf32> to vector<2x8x8xf32>
    %80 = arith.subf %76, %79 : vector<2x8x8xf32>
    %81 = math.exp %80 : vector<2x8x8xf32>
    %cst_31 = arith.constant dense<0.000000e+00> : vector<2x8xf32>
    %82 = vector.multi_reduction <add>, %81, %cst_31 [2] : vector<2x8x8xf32> to vector<2x8xf32>
    %83 = vector.shape_cast %82 : vector<2x8xf32> to vector<2x8x1xf32>
    %84 = tpu.reciprocal %83 {approx = true} : vector<2x8x1xf32> -> vector<2x8x1xf32>
    %85 = vector.broadcast %84 : vector<2x8x1xf32> to vector<2x8x8xf32>
    %86 = arith.mulf %81, %85 : vector<2x8x8xf32>
    "tpu.trace_start"() <{level = 10 : i32, message = "bqk,bkd->bqd"}> : () -> ()
    %cst_32 = arith.constant dense<0.000000e+00> : vector<2x8x8xf32>
    %87 = tpu.matmul %86, %75, %cst_32 {dimension_numbers = #tpu.dot_dimension_numbers<[2], [1], [1], [2], [0, 0, 0, 1, 1, 2], [0], [0]>} : vector<2x8x8xf32>, vector<2x8x8xf32>, vector<2x8x8xf32> -> vector<2x8x8xf32>
    "tpu.trace_stop"() : () -> ()
    %88 = vector.extract_strided_slice %36 {offsets = [0, 0, 24], sizes = [2, 8, 8], strides = [1, 1, 1]} : vector<2x8x96xf32> to vector<2x8x8xf32>
    %cst_33 = arith.constant 0.353553385 : f32
    %89 = vector.broadcast %cst_33 : f32 to vector<2x8x8xf32>
    %90 = arith.mulf %88, %89 : vector<2x8x8xf32>
    %91 = vector.extract_strided_slice %36 {offsets = [0, 0, 56], sizes = [2, 8, 8], strides = [1, 1, 1]} : vector<2x8x96xf32> to vector<2x8x8xf32>
    %92 = vector.extract_strided_slice %36 {offsets = [0, 0, 88], sizes = [2, 8, 8], strides = [1, 1, 1]} : vector<2x8x96xf32> to vector<2x8x8xf32>
    "tpu.trace_start"() <{level = 10 : i32, message = "bqd,bkd->bqk"}> : () -> ()
    %cst_34 = arith.constant dense<0.000000e+00> : vector<2x8x8xf32>
    %93 = tpu.matmul %90, %91, %cst_34 {dimension_numbers = #tpu.dot_dimension_numbers<[2], [2], [1], [1], [0, 0, 0, 1, 1, 1], [0], [0]>} : vector<2x8x8xf32>, vector<2x8x8xf32>, vector<2x8x8xf32> -> vector<2x8x8xf32>
    "tpu.trace_stop"() : () -> ()
    %cst_35 = arith.constant dense<0xFF800000> : vector<2x8xf32>
    %94 = vector.multi_reduction <maximumf>, %93, %cst_35 [2] : vector<2x8x8xf32> to vector<2x8xf32>
    %95 = vector.shape_cast %94 : vector<2x8xf32> to vector<2x8x1xf32>
    %96 = vector.broadcast %95 : vector<2x8x1xf32> to vector<2x8x8xf32>
    %97 = arith.subf %93, %96 : vector<2x8x8xf32>
    %98 = math.exp %97 : vector<2x8x8xf32>
    %cst_36 = arith.constant dense<0.000000e+00> : vector<2x8xf32>
    %99 = vector.multi_reduction <add>, %98, %cst_36 [2] : vector<2x8x8xf32> to vector<2x8xf32>
    %100 = vector.shape_cast %99 : vector<2x8xf32> to vector<2x8x1xf32>
    %101 = tpu.reciprocal %100 {approx = true} : vector<2x8x1xf32> -> vector<2x8x1xf32>
    %102 = vector.broadcast %101 : vector<2x8x1xf32> to vector<2x8x8xf32>
    %103 = arith.mulf %98, %102 : vector<2x8x8xf32>
    "tpu.trace_start"() <{level = 10 : i32, message = "bqk,bkd->bqd"}> : () -> ()
    %cst_37 = arith.constant dense<0.000000e+00> : vector<2x8x8xf32>
    %104 = tpu.matmul %103, %92, %cst_37 {dimension_numbers = #tpu.dot_dimension_numbers<[2], [1], [1], [2], [0, 0, 0, 1, 1, 2], [0], [0]>} : vector<2x8x8xf32>, vector<2x8x8xf32>, vector<2x8x8xf32> -> vector<2x8x8xf32>
    "tpu.trace_stop"() : () -> ()
    %105 = tpu.concatenate %53, %70, %87, %104 in 2 : vector<2x8x8xf32>, vector<2x8x8xf32>, vector<2x8x8xf32>, vector<2x8x8xf32> -> vector<2x8x32xf32>
    %106 = vector.shape_cast %105 : vector<2x8x32xf32> to vector<16x32xf32>
    %c0_38 = arith.constant 0 : index
    %c0_39 = arith.constant 0 : index
    %107 = vector.load %arg2[%c0_38, %c0_39] : memref<32x32xf32, #tpu.memory_space<vmem>>, vector<32x32xf32>
    %cst_40 = arith.constant dense<0.000000e+00> : vector<16x32xf32>
    %108 = tpu.matmul %106, %107, %cst_40 {dimension_numbers = #tpu.dot_dimension_numbers<[1], [0], [0], [1], [0, 0, 1, 1], [], []>} : vector<16x32xf32>, vector<32x32xf32>, vector<16x32xf32> -> vector<16x32xf32>
    %109 = vector.broadcast %2 : vector<1x32xf32> to vector<16x32xf32>
    %110 = arith.addf %108, %109 : vector<16x32xf32>
    %111 = arith.addf %9, %110 : vector<16x32xf32>
    %cst_41 = arith.constant dense<0.000000e+00> : vector<16xf32>
    %112 = vector.multi_reduction <add>, %111, %cst_41 [1] : vector<16x32xf32> to vector<16xf32>
    %113 = vector.shape_cast %112 : vector<16xf32> to vector<16x1xf32>
    %cst_42 = arith.constant 3.200000e+01 : f32
    %114 = vector.broadcast %cst_42 : f32 to vector<16x1xf32>
    %115 = arith.divf %113, %114 : vector<16x1xf32>
    %116 = vector.broadcast %115 : vector<16x1xf32> to vector<16x32xf32>
    %117 = arith.subf %111, %116 : vector<16x32xf32>
    %118 = arith.mulf %117, %117 : vector<16x32xf32>
    %cst_43 = arith.constant dense<0.000000e+00> : vector<16xf32>
    %119 = vector.multi_reduction <add>, %118, %cst_43 [1] : vector<16x32xf32> to vector<16xf32>
    %120 = vector.shape_cast %119 : vector<16xf32> to vector<16x1xf32>
    %cst_44 = arith.constant 3.200000e+01 : f32
    %121 = vector.broadcast %cst_44 : f32 to vector<16x1xf32>
    %122 = arith.divf %120, %121 : vector<16x1xf32>
    %123 = vector.broadcast %115 : vector<16x1xf32> to vector<16x32xf32>
    %124 = arith.subf %111, %123 : vector<16x32xf32>
    %cst_45 = arith.constant 9.99999974E-6 : f32
    %125 = vector.broadcast %cst_45 : f32 to vector<16x1xf32>
    %126 = arith.addf %122, %125 : vector<16x1xf32>
    %127 = math.rsqrt %126 : vector<16x1xf32>
    %128 = vector.broadcast %127 : vector<16x1xf32> to vector<16x32xf32>
    %129 = arith.mulf %124, %128 : vector<16x32xf32>
    %130 = vector.broadcast %3 : vector<1x32xf32> to vector<16x32xf32>
    %131 = arith.mulf %129, %130 : vector<16x32xf32>
    %132 = vector.broadcast %4 : vector<1x32xf32> to vector<16x32xf32>
    %133 = arith.addf %131, %132 : vector<16x32xf32>
    %c0_46 = arith.constant 0 : index
    %c0_47 = arith.constant 0 : index
    %134 = vector.load %arg3[%c0_46, %c0_47] : memref<32x64xf32, #tpu.memory_space<vmem>>, vector<32x64xf32>
    %cst_48 = arith.constant dense<0.000000e+00> : vector<16x64xf32>
    %135 = tpu.matmul %133, %134, %cst_48 {dimension_numbers = #tpu.dot_dimension_numbers<[1], [0], [0], [1], [0, 0, 1, 1], [], []>} : vector<16x32xf32>, vector<32x64xf32>, vector<16x64xf32> -> vector<16x64xf32>
    %136 = vector.broadcast %7 : vector<1x64xf32> to vector<16x64xf32>
    %137 = arith.addf %135, %136 : vector<16x64xf32>
    %cst_49 = arith.constant 5.000000e-01 : f32
    %138 = vector.broadcast %cst_49 : f32 to vector<16x64xf32>
    %139 = arith.mulf %138, %137 : vector<16x64xf32>
    %cst_50 = arith.constant 1.41421354 : f32
    %140 = vector.broadcast %cst_50 : f32 to vector<16x64xf32>
    %141 = arith.divf %137, %140 : vector<16x64xf32>
    %142 = math.erf %141 : vector<16x64xf32>
    %cst_51 = arith.constant 1.000000e+00 : f32
    %143 = vector.broadcast %cst_51 : f32 to vector<16x64xf32>
    %144 = arith.addf %143, %142 : vector<16x64xf32>
    %145 = arith.mulf %139, %144 : vector<16x64xf32>
    %c0_52 = arith.constant 0 : index
    %c0_53 = arith.constant 0 : index
    %146 = vector.load %arg4[%c0_52, %c0_53] : memref<64x32xf32, #tpu.memory_space<vmem>>, vector<64x32xf32>
    %cst_54 = arith.constant dense<0.000000e+00> : vector<16x32xf32>
    %147 = tpu.matmul %145, %146, %cst_54 {dimension_numbers = #tpu.dot_dimension_numbers<[1], [0], [0], [1], [0, 0, 1, 1], [], []>} : vector<16x64xf32>, vector<64x32xf32>, vector<16x32xf32> -> vector<16x32xf32>
    %148 = vector.broadcast %5 : vector<1x32xf32> to vector<16x32xf32>
    %149 = arith.addf %147, %148 : vector<16x32xf32>
    %150 = arith.addf %111, %149 : vector<16x32xf32>
    %151 = vector.shape_cast %150 : vector<16x32xf32> to vector<2x8x32xf32>
    %c0_55 = arith.constant 0 : index
    %c0_56 = arith.constant 0 : index
    %c0_57 = arith.constant 0 : index
    %152 = vector.load %arg6[%c0_55, %c0_56, %c0_57] : memref<2x8x32xf32, #tpu.memory_space<vmem>>, vector<2x8x32xf32>
    tpu.vector_store %arg6[%c0_55, %c0_56, %c0_57], %151 {strides = array<i32>} : memref<2x8x32xf32, #tpu.memory_space<vmem>>, vector<2x8x32xf32>,
    return
  }
}

</mosaic_0001>

<llo_original>
// kernel: tpu_custom_call.1
$region0: #{tpu_custom_call.1}
  #allocation0 [shape = 'u32[]', space=smem, size = 0x4, offset = 0x4, fixed_abs, tag = 'smem constant byte address 0x4 - core index']
  #allocation1 [shape = 'u32[144,128]{1,0:T(1,128)}', space=vmem, size = 0x12000, scoped, tag = 'internal scratch']
  %s0 = inlined_call_operand.hbm [shape: f32[2,8,32], index: 0, kind: input, shape index: {}]
  %s1 = inlined_call_operand.vmem [shape: f32[32,96], index: 1, kind: input, shape index: {}]
  %s2 = inlined_call_operand.vmem [shape: f32[32,32], index: 2, kind: input, shape index: {}]
  %s3 = inlined_call_operand.vmem [shape: f32[32,64], index: 3, kind: input, shape index: {}]
  %s4 = inlined_call_operand.vmem [shape: f32[64,32], index: 4, kind: input, shape index: {}]
  %s5 = inlined_call_operand.vmem [shape: f32[8,128], index: 5, kind: input, shape index: {}]
  %s6 = inlined_call_operand.hbm [shape: f32[2,8,32], index: 6, kind: output, shape index: {}]
  %s7 = sld [smem:[#allocation0]]
  $region38: #{tpu_custom_call.1} parent=0
    _
  %s9 = ssub.s32 1, %s7
  %s10 = scalar_select 0, %s9, %s7
  $region1: #{tpu_custom_call.1} parent=0
    #allocation2 [shape = 'u8[8192]{0}', space=vmem, size = 0x2000, scoped, tag = 'input window, operand 0, single buffered']
    #allocation3 [shape = 's32[1]{0}', space=sflag, size = 0x4, scoped, tag = 'scoped memory for tpu_custom_call.1']
    #allocation4 [shape = 's32[1]{0}', space=sflag, size = 0x4, scoped, tag = 'scoped memory for tpu_custom_call.1']
    #allocation5 [shape = 'u8[8192]{0}', space=vmem, size = 0x2000, scoped, tag = 'output window, operand 0, single buffered']
    %11 = vsyncpa [#allocation3], 0
    %12 = vsyncpa [#allocation4], 0
    // Predicated region
    $region2: #{tpu_custom_call.1} parent=1 // pred_check
      _
    $region3: #{tpu_custom_call.1} parent=1 // pred_check_branch
      %14 = sbr.rel (0) target = $region5
    $region4: #{tpu_custom_call.1} parent=1 // pred_region
      %s16 = ssub.s32 256, 256
      %17 = vsyncadd [#allocation3], %s16
      %s18 = sshll.u32 [#allocation2], 4
      %s19 = int_to_ptr.vmem [resolvable:$true] %s18
      %24 = dma.hbm_to_vmem [thread:$0]  %s0, 256, %s19, [#allocation3], 128, 128, 8
    $region5: #{tpu_custom_call.1} parent=1 // pred_fallthru
      _
    // Predicated region
    $region6: #{tpu_custom_call.1} parent=1 // pred_check
      _
    $region7: #{tpu_custom_call.1} parent=1 // pred_check_branch
      %26 = sbr.rel (0) target = $region9
    $region8: #{tpu_custom_call.1} parent=1 // pred_region
      _
    $region9: #{tpu_custom_call.1} parent=1 // pred_fallthru
      _
    // Predicated region
    $region10: #{tpu_custom_call.1} parent=1 // pred_check
      _
    $region11: #{tpu_custom_call.1} parent=1 // pred_check_branch
      %28 = sbr.rel (0) target = $region13
    $region12: #{tpu_custom_call.1} parent=1 // pred_region
      _
    $region13: #{tpu_custom_call.1} parent=1 // pred_fallthru
      _
    // Predicated region
    $region14: #{tpu_custom_call.1} parent=1 // pred_check
      _
    $region15: #{tpu_custom_call.1} parent=1 // pred_check_branch
      %30 = sbr.rel (0) target = $region17
    $region16: #{tpu_custom_call.1} parent=1 // pred_region
      _
    $region17: #{tpu_custom_call.1} parent=1 // pred_fallthru
      _
    // Predicated region
    $region18: #{tpu_custom_call.1} parent=1 // pred_check
      _
    $region19: #{tpu_custom_call.1} parent=1 // pred_check_branch
      %32 = sbr.rel (0) target = $region21
    $region20: #{tpu_custom_call.1} parent=1 // pred_region
      _
    $region21: #{tpu_custom_call.1} parent=1 // pred_fallthru
      _
    // Predicated region
    $region22: #{tpu_custom_call.1} parent=1 // pred_check
      _
    $region23: #{tpu_custom_call.1} parent=1 // pred_check_branch
      %34 = sbr.rel (0) target = $region25
    $region24: #{tpu_custom_call.1} parent=1 // pred_region
      _
    $region25: #{tpu_custom_call.1} parent=1 // pred_fallthru
      _
    // Predicated region
    $region26: #{tpu_custom_call.1} parent=1 // pred_check
      _
    $region27: #{tpu_custom_call.1} parent=1 // pred_check_branch
      %36 = sbr.rel (0) target = $region29
    $region28: #{tpu_custom_call.1} parent=1 // pred_region
      %37 = dma.done [#allocation3], 256
    $region29: #{tpu_custom_call.1} parent=1 // pred_fallthru
      _
    %v38 = vld [vmem:[%s5] sm:$0x1]
    %v39 = vld [vmem:[%s5 + $0x1] sm:$0x1]
    %v40 = vld [vmem:[%s5 + $0x2] sm:$0x1]
    %v41 = vld [vmem:[%s5 + $0x3] sm:$0x1]
    %v42 = vld [vmem:[%s5 + $0x4] sm:$0x1]
    %v43 = vld [vmem:[%s5 + $0x5] sm:$0x1]
    %v44 = vld [vmem:[%s5 + $0x6] sm:$0x1]
    %v45 = vld [vmem:[%s5 + $0x7] sm:$0x1]
    %v46 = vld [vmem:[#allocation2] sm:$0xff]
    %v47 = vld [vmem:[#allocation2 + $0x8] sm:$0xff]
    %vm48 = vcmask 261120
    %v49 = vsel %vm48, %v46, 0.0
    %50 = vadd.xlane.f32.xlu0 %v49
    %v51 = vpop.xlane.xlu0 %50
    %v52 = vsel %vm48, %v47, 0.0
    %53 = vadd.xlane.f32.xlu0 %v52
    %v54 = vpop.xlane.xlu0 %53
    %v55 = vrcp.pop 32.0
    %v56 = vmul.f32 %v51, %v55
    %v57 = vmul.f32 %v54, %v55
    %v58 = vsub.f32 %v46, %v56
    %v59 = vsub.f32 %v47, %v57
    %v60 = vmul.f32 %v58, %v58
    %v61 = vmul.f32 %v59, %v59
    %v62 = vsel %vm48, %v60, 0.0
    %63 = vadd.xlane.f32.xlu0 %v62
    %v64 = vpop.xlane.xlu0 %63
    %v65 = vsel %vm48, %v61, 0.0
    %66 = vadd.xlane.f32.xlu0 %v65
    %v67 = vpop.xlane.xlu0 %66
    %v68 = vmul.f32 %v64, %v55
    %v69 = vmul.f32 %v67, %v55
    %v70 = vadd.f32 %v68, 1e-05
    %v71 = vadd.f32 %v69, 1e-05
    %v72 = vrsqrt.pop %v70
    %v73 = vrsqrt.pop %v71
    %v74 = vmul.f32 %v58, %v72
    %v75 = vmul.f32 %v59, %v73
    %v76 = vlaneseq
    %v77 = vshrl.u32 %v76, 7
    %v78 = vsub.s32 0, %v77
    %v79 = vrot.slane %v38, %v78
    %v80 = vmul.f32 %v74, %v79
    %v81 = vmul.f32 %v75, %v79
    %v82 = vlaneseq
    %v83 = vshrl.u32 %v82, 7
    %v84 = vsub.s32 0, %v83
    %v85 = vrot.slane %v39, %v84
    %v86 = vadd.f32 %v80, %v85
    %v87 = vadd.f32 %v81, %v85
    %v88 = vld [vmem:[%s1] sm:$0xff]
    %v89 = vld [vmem:[%s1 + $0x8] sm:$0xff]
    %v90 = vld [vmem:[%s1 + $0x10] sm:$0xff]
    %v91 = vld [vmem:[%s1 + $0x18] sm:$0xff]
    %v92 = vlaneseq
    %v93 = vshrl.u32 %v92, 7
    %v94 = vsub.s32 0, %v93
    %v95 = vrot.slane %v44, %v94
    %v97 = vsel %vm48, %v86, 0
    %v100 = vsel %vm48, %v87, 0
    %102 = vmatprep.subr.mxu0 0.0
    %103 = vmatpush1.msra.mxu0 %v88
    %104 = vmatprep.subr.mxu0 0.0
    %105 = vmatpush1.msra.mxu0 %v89
    %106 = vmatprep.subr.mxu0 0.0
    %107 = vmatpush1.msra.mxu0 %v90
    %108 = vmatprep.subr.mxu0 0.0
    %109 = vmatpush1.msra.mxu0 %v91
    %110 = vmatprep.subr.mxu0 0.0
    %111 = vmatpush1.msra.mxu0 0.0
    %112 = vmatprep.subr.mxu0 0.0
    %113 = vmatpush1.msra.mxu0 0.0
    %114 = vmatprep.subr.mxu0 0.0
    %115 = vmatpush1.msra.mxu0 0.0
    %116 = vmatprep.subr.mxu0 0.0
    %117 = vmatpush1.msra.mxu0 0.0
    %118 = vmatprep.subr.mxu0 0.0
    %119 = vmatpush1.msra.mxu0 0.0
    %120 = vmatprep.subr.mxu0 0.0
    %121 = vmatpush1.msra.mxu0 0.0
    %122 = vmatprep.subr.mxu0 0.0
    %123 = vmatpush1.msra.mxu0 0.0
    %124 = vmatprep.subr.mxu0 0.0
    %125 = vmatpush1.msra.mxu0 0.0
    %126 = vmatprep.subr.mxu0 0.0
    %127 = vmatpush1.msra.mxu0 0.0
    %128 = vmatprep.subr.mxu0 0.0
    %129 = vmatpush1.msra.mxu0 0.0
    %130 = vmatprep.subr.mxu0 0.0
    %131 = vmatpush1.msra.mxu0 0.0
    %132 = vmatprep.subr.mxu0 0.0
    %133 = vmatpush1.msra.mxu0 0.0
    %134 = vmatprep.subr.mxu0 0.0
    %135 = vmatpush1.msra.mxu0 0.0
    %136 = vmatprep.subr.mxu0 0.0
    %137 = vmatpush1.msra.mxu0 0.0
    %138 = vmatprep.subr.mxu0 0.0
    %139 = vmatpush1.msra.mxu0 0.0
    %140 = vmatprep.subr.mxu0 0.0
    %141 = vmatpush1.msra.mxu0 0.0
    %142 = vmatprep.subr.mxu0 0.0
    %143 = vmatpush1.msra.mxu0 0.0
    %144 = vmatprep.subr.mxu0 0.0
    %145 = vmatpush1.msra.mxu0 0.0
    %146 = vmatprep.subr.mxu0 0.0
    %147 = vmatpush1.msra.mxu0 0.0
    %148 = vmatprep.subr.mxu0 0.0
    %149 = vmatpush1.msra.mxu0 0.0
    %150 = vmatprep.subr.mxu0 0.0
    %151 = vmatpush1.msra.mxu0 0.0
    %152 = vmatprep.subr.mxu0 0.0
    %153 = vmatpush1.msra.mxu0 0.0
    %154 = vmatprep.subr.mxu0 0.0
    %155 = vmatpush1.msra.mxu0 0.0
    %156 = vmatprep.subr.mxu0 0.0
    %157 = vmatpush1.msra.mxu0 0.0
    %158 = vmatprep.subr.mxu0 0.0
    %159 = vmatpush1.msra.mxu0 0.0
    %160 = vmatprep.subr.mxu0 0.0
    %161 = vmatpush1.msra.mxu0 0.0
    %162 = vmatprep.subr.mxu0 0.0
    %163 = vmatpush1.msra.mxu0 0.0
    %164 = vmatprep.subr.mxu0 0.0
    %165 = vmatpush1.msra.mxu0 0.0
    %166 = vmatprep.mubr.f32.mxu0 0.0
    %167 = vmatmul.mubr.f32.gmra.mrb[0].mxu0 %v97
    %v168 = vpop.f32.mrb[0].mxu0
    %v169 = vadd.f32 %v95, %v168
    %v170 = vpop.f32.mrb[0].mxu0
    %171 = vmatprep.mubr.f32.mxu0 0.0
    %172 = vmatmul.mubr.f32.gmra.mrb[0].mxu0 %v100
    %v173 = vpop.f32.mrb[0].mxu0
    %v174 = vadd.f32 %v95, %v173
    %v175 = vpop.f32.mrb[0].mxu0
    %176 = vdwg.mxu0
    %v177 = vmul.f32 %v169, 0.35355338
    %v178 = vmul.f32 %v174, 0.35355338
    %180 = vrot.lane.b32.xlu0 %v169, 96
    %v181 = vpop.permute.xlu0 %180
    %vm182 = vcmask 64512
    %v184 = vsel %vm182, %v177, 0
    %v186 = vsel %vm182, %v181, 0
    %188 = vmatprep.subr.mxu0 0.0
    %189 = vmatpush1.xpose.msra.mxu0 %v186
    %190 = vmatprep.subr.mxu0 0.0
    %191 = vmatpush1.xpose.msra.mxu0 0.0
    %192 = vmatprep.subr.mxu0 0.0
    %193 = vmatpush1.xpose.msra.mxu0 0.0
    %194 = vmatprep.subr.mxu0 0.0
    %195 = vmatpush1.xpose.msra.mxu0 0.0
    %196 = vmatprep.subr.mxu0 0.0
    %197 = vmatpush1.xpose.msra.mxu0 0.0
    %198 = vmatprep.subr.mxu0 0.0
    %199 = vmatpush1.xpose.msra.mxu0 0.0
    %200 = vmatprep.subr.mxu0 0.0
    %201 = vmatpush1.xpose.msra.mxu0 0.0
    %202 = vmatprep.subr.mxu0 0.0
    %203 = vmatpush1.xpose.msra.mxu0 0.0
    %204 = vmatprep.subr.mxu0 0.0
    %205 = vmatpush1.xpose.msra.mxu0 0.0
    %206 = vmatprep.subr.mxu0 0.0
    %207 = vmatpush1.xpose.msra.mxu0 0.0
    %208 = vmatprep.subr.mxu0 0.0
    %209 = vmatpush1.xpose.msra.mxu0 0.0
    %210 = vmatprep.subr.mxu0 0.0
    %211 = vmatpush1.xpose.msra.mxu0 0.0
    %212 = vmatprep.subr.mxu0 0.0
    %213 = vmatpush1.xpose.msra.mxu0 0.0
    %214 = vmatprep.subr.mxu0 0.0
    %215 = vmatpush1.xpose.msra.mxu0 0.0
    %216 = vmatprep.subr.mxu0 0.0
    %217 = vmatpush1.xpose.msra.mxu0 0.0
    %218 = vmatprep.subr.mxu0 0.0
    %219 = vmatpush1.xpose.msra.mxu0 0.0
    %220 = vmatprep.subr.mxu0 0.0
    %221 = vmatpush1.xpose.msra.mxu0 0.0
    %222 = vmatprep.subr.mxu0 0.0
    %223 = vmatpush1.xpose.msra.mxu0 0.0
    %224 = vmatprep.subr.mxu0 0.0
    %225 = vmatpush1.xpose.msra.mxu0 0.0
    %226 = vmatprep.subr.mxu0 0.0
    %227 = vmatpush1.xpose.msra.mxu0 0.0
    %228 = vmatprep.subr.mxu0 0.0
    %229 = vmatpush1.xpose.msra.mxu0 0.0
    %230 = vmatprep.subr.mxu0 0.0
    %231 = vmatpush1.xpose.msra.mxu0 0.0
    %232 = vmatprep.subr.mxu0 0.0
    %233 = vmatpush1.xpose.msra.mxu0 0.0
    %234 = vmatprep.subr.mxu0 0.0
    %235 = vmatpush1.xpose.msra.mxu0 0.0
    %236 = vmatprep.subr.mxu0 0.0
    %237 = vmatpush1.xpose.msra.mxu0 0.0
    %238 = vmatprep.subr.mxu0 0.0
    %239 = vmatpush1.xpose.msra.mxu0 0.0
    %240 = vmatprep.subr.mxu0 0.0
    %241 = vmatpush1.xpose.msra.mxu0 0.0
    %242 = vmatprep.subr.mxu0 0.0
    %243 = vmatpush1.xpose.msra.mxu0 0.0
    %244 = vmatprep.subr.mxu0 0.0
    %245 = vmatpush1.xpose.msra.mxu0 0.0
    %246 = vmatprep.subr.mxu0 0.0
    %247 = vmatpush1.xpose.msra.mxu0 0.0
    %248 = vmatprep.subr.mxu0 0.0
    %249 = vmatpush1.xpose.msra.mxu0 0.0
    %250 = vmatprep.subr.mxu0 0.0
    %251 = vmatpush1.xpose.msra.mxu0 0.0
    %252 = vmatprep.mubr.f32.mxu0 0.0
    %253 = vmatmul.mubr.f32.gmra.mrb[0].mxu0 %v184
    %v254 = vpop.f32.mrb[0].mxu0
    %v255 = vadd.f32 0.0, %v254
    %v256 = vpop.f32.mrb[0].mxu0
    %257 = vdwg.mxu0
    %259 = vrot.lane.b32.xlu0 %v174, 96
    %v260 = vpop.permute.xlu0 %259
    %v262 = vsel %vm182, %v178, 0
    %v264 = vsel %vm182, %v260, 0
    %266 = vmatprep.subr.mxu0 0.0
    %267 = vmatpush1.xpose.msra.mxu0 %v264
    %268 = vmatprep.subr.mxu0 0.0
    %269 = vmatpush1.xpose.msra.mxu0 0.0
    %270 = vmatprep.subr.mxu0 0.0
    %271 = vmatpush1.xpose.msra.mxu0 0.0
    %272 = vmatprep.subr.mxu0 0.0
    %273 = vmatpush1.xpose.msra.mxu0 0.0
    %274 = vmatprep.subr.mxu0 0.0
    %275 = vmatpush1.xpose.msra.mxu0 0.0
    %276 = vmatprep.subr.mxu0 0.0
    %277 = vmatpush1.xpose.msra.mxu0 0.0
    %278 = vmatprep.subr.mxu0 0.0
    %279 = vmatpush1.xpose.msra.mxu0 0.0
    %280 = vmatprep.subr.mxu0 0.0
    %281 = vmatpush1.xpose.msra.mxu0 0.0
    %282 = vmatprep.subr.mxu0 0.0
    %283 = vmatpush1.xpose.msra.mxu0 0.0
    %284 = vmatprep.subr.mxu0 0.0
    %285 = vmatpush1.xpose.msra.mxu0 0.0
    %286 = vmatprep.subr.mxu0 0.0
    %287 = vmatpush1.xpose.msra.mxu0 0.0
    %288 = vmatprep.subr.mxu0 0.0
    %289 = vmatpush1.xpose.msra.mxu0 0.0
    %290 = vmatprep.subr.mxu0 0.0
    %291 = vmatpush1.xpose.msra.mxu0 0.0
    %292 = vmatprep.subr.mxu0 0.0
    %293 = vmatpush1.xpose.msra.mxu0 0.0
    %294 = vmatprep.subr.mxu0 0.0
    %295 = vmatpush1.xpose.msra.mxu0 0.0
    %296 = vmatprep.subr.mxu0 0.0
    %297 = vmatpush1.xpose.msra.mxu0 0.0
    %298 = vmatprep.subr.mxu0 0.0
    %299 = vmatpush1.xpose.msra.mxu0 0.0
    %300 = vmatprep.subr.mxu0 0.0
    %301 = vmatpush1.xpose.msra.mxu0 0.0
    %302 = vmatprep.subr.mxu0 0.0
    %303 = vmatpush1.xpose.msra.mxu0 0.0
    %304 = vmatprep.subr.mxu0 0.0
    %305 = vmatpush1.xpose.msra.mxu0 0.0
    %306 = vmatprep.subr.mxu0 0.0
    %307 = vmatpush1.xpose.msra.mxu0 0.0
    %308 = vmatprep.subr.mxu0 0.0
    %309 = vmatpush1.xpose.msra.mxu0 0.0
    %310 = vmatprep.subr.mxu0 0.0
    %311 = vmatpush1.xpose.msra.mxu0 0.0
    %312 = vmatprep.subr.mxu0 0.0
    %313 = vmatpush1.xpose.msra.mxu0 0.0
    %314 = vmatprep.subr.mxu0 0.0
    %315 = vmatpush1.xpose.msra.mxu0 0.0
    %316 = vmatprep.subr.mxu0 0.0
    %317 = vmatpush1.xpose.msra.mxu0 0.0
    %318 = vmatprep.subr.mxu0 0.0
    %319 = vmatpush1.xpose.msra.mxu0 0.0
    %320 = vmatprep.subr.mxu0 0.0
    %321 = vmatpush1.xpose.msra.mxu0 0.0
    %322 = vmatprep.subr.mxu0 0.0
    %323 = vmatpush1.xpose.msra.mxu0 0.0
    %324 = vmatprep.subr.mxu0 0.0
    %325 = vmatpush1.xpose.msra.mxu0 0.0
    %326 = vmatprep.subr.mxu0 0.0
    %327 = vmatpush1.xpose.msra.mxu0 0.0
    %328 = vmatprep.subr.mxu0 0.0
    %329 = vmatpush1.xpose.msra.mxu0 0.0
    %330 = vmatprep.mubr.f32.mxu0 0.0
    %331 = vmatmul.mubr.f32.gmra.mrb[0].mxu0 %v262
    %v332 = vpop.f32.mrb[0].mxu0
    %v333 = vadd.f32 0.0, %v332
    %v334 = vpop.f32.mrb[0].mxu0
    %335 = vdwg.mxu0
    %v336 = vsel %vm182, %v255, -inf
    %337 = vmax.xlane.f32.xlu0 %v336
    %v338 = vpop.xlane.xlu0 %337
    %v339 = vsel %vm182, %v333, -inf
    %340 = vmax.xlane.f32.xlu0 %v339
    %v341 = vpop.xlane.xlu0 %340
    %v342 = vsub.f32 %v255, %v338
    %v343 = vsub.f32 %v333, %v341
    %v344 = vmul.f32 %v342, 1.442695
    %v345 = vpow.pop %v344
    %v346 = vmul.f32 %v343, 1.442695
    %v347 = vpow.pop %v346
    %v348 = vsel %vm182, %v345, 0.0
    %349 = vadd.xlane.f32.xlu0 %v348
    %v350 = vpop.xlane.xlu0 %349
    %v351 = vsel %vm182, %v347, 0.0
    %352 = vadd.xlane.f32.xlu0 %v351
    %v353 = vpop.xlane.xlu0 %352
    %v354 = vrcp.pop %v350
    %v355 = vrcp.pop %v353
    %v356 = vmul.f32 %v345, %v354
    %v357 = vmul.f32 %v347, %v355
    %358 = vrot.lane.b32.xlu0 %v169, 64
    %v359 = vpop.permute.xlu0 %358
    %v362 = vsel %vm182, %v356, 0
    %364 = vmatprep.subr.mxu0 0.0
    %365 = vmatpush1.msra.mxu0 %v359
    %366 = vmatprep.subr.mxu0 0.0
    %367 = vmatpush1.msra.mxu0 0.0
    %368 = vmatprep.subr.mxu0 0.0
    %369 = vmatpush1.msra.mxu0 0.0
    %370 = vmatprep.subr.mxu0 0.0
    %371 = vmatpush1.msra.mxu0 0.0
    %372 = vmatprep.subr.mxu0 0.0
    %373 = vmatpush1.msra.mxu0 0.0
    %374 = vmatprep.subr.mxu0 0.0
    %375 = vmatpush1.msra.mxu0 0.0
    %376 = vmatprep.subr.mxu0 0.0
    %377 = vmatpush1.msra.mxu0 0.0
    %378 = vmatprep.subr.mxu0 0.0
    %379 = vmatpush1.msra.mxu0 0.0
    %380 = vmatprep.subr.mxu0 0.0
    %381 = vmatpush1.msra.mxu0 0.0
    %382 = vmatprep.subr.mxu0 0.0
    %383 = vmatpush1.msra.mxu0 0.0
    %384 = vmatprep.subr.mxu0 0.0
    %385 = vmatpush1.msra.mxu0 0.0
    %386 = vmatprep.subr.mxu0 0.0
    %387 = vmatpush1.msra.mxu0 0.0
    %388 = vmatprep.subr.mxu0 0.0
    %389 = vmatpush1.msra.mxu0 0.0
    %390 = vmatprep.subr.mxu0 0.0
    %391 = vmatpush1.msra.mxu0 0.0
    %392 = vmatprep.subr.mxu0 0.0
    %393 = vmatpush1.msra.mxu0 0.0
    %394 = vmatprep.subr.mxu0 0.0
    %395 = vmatpush1.msra.mxu0 0.0
    %396 = vmatprep.subr.mxu0 0.0
    %397 = vmatpush1.msra.mxu0 0.0
    %398 = vmatprep.subr.mxu0 0.0
    %399 = vmatpush1.msra.mxu0 0.0
    %400 = vmatprep.subr.mxu0 0.0
    %401 = vmatpush1.msra.mxu0 0.0
    %402 = vmatprep.subr.mxu0 0.0
    %403 = vmatpush1.msra.mxu0 0.0
    %404 = vmatprep.subr.mxu0 0.0
    %405 = vmatpush1.msra.mxu0 0.0
    %406 = vmatprep.subr.mxu0 0.0
    %407 = vmatpush1.msra.mxu0 0.0
    %408 = vmatprep.subr.mxu0 0.0
    %409 = vmatpush1.msra.mxu0 0.0
    %410 = vmatprep.subr.mxu0 0.0
    %411 = vmatpush1.msra.mxu0 0.0
    %412 = vmatprep.subr.mxu0 0.0
    %413 = vmatpush1.msra.mxu0 0.0
    %414 = vmatprep.subr.mxu0 0.0
    %415 = vmatpush1.msra.mxu0 0.0
    %416 = vmatprep.subr.mxu0 0.0
    %417 = vmatpush1.msra.mxu0 0.0
    %418 = vmatprep.subr.mxu0 0.0
    %419 = vmatpush1.msra.mxu0 0.0
    %420 = vmatprep.subr.mxu0 0.0
    %421 = vmatpush1.msra.mxu0 0.0
    %422 = vmatprep.subr.mxu0 0.0
    %423 = vmatpush1.msra.mxu0 0.0
    %424 = vmatprep.subr.mxu0 0.0
    %425 = vmatpush1.msra.mxu0 0.0
    %426 = vmatprep.subr.mxu0 0.0
    %427 = vmatpush1.msra.mxu0 0.0
    %428 = vmatprep.mubr.f32.mxu0 0.0
    %429 = vmatmul.mubr.f32.gmra.mrb[0].mxu0 %v362
    %v430 = vpop.f32.mrb[0].mxu0
    %v431 = vadd.f32 0.0, %v430
    %v432 = vpop.f32.mrb[0].mxu0
    %433 = vdwg.mxu0
    %434 = vrot.lane.b32.xlu0 %v174, 64
    %v435 = vpop.permute.xlu0 %434
    %v438 = vsel %vm182, %v357, 0
    %440 = vmatprep.subr.mxu0 0.0
    %441 = vmatpush1.msra.mxu0 %v435
    %442 = vmatprep.subr.mxu0 0.0
    %443 = vmatpush1.msra.mxu0 0.0
    %444 = vmatprep.subr.mxu0 0.0
    %445 = vmatpush1.msra.mxu0 0.0
    %446 = vmatprep.subr.mxu0 0.0
    %447 = vmatpush1.msra.mxu0 0.0
    %448 = vmatprep.subr.mxu0 0.0
    %449 = vmatpush1.msra.mxu0 0.0
    %450 = vmatprep.subr.mxu0 0.0
    %451 = vmatpush1.msra.mxu0 0.0
    %452 = vmatprep.subr.mxu0 0.0
    %453 = vmatpush1.msra.mxu0 0.0
    %454 = vmatprep.subr.mxu0 0.0
    %455 = vmatpush1.msra.mxu0 0.0
    %456 = vmatprep.subr.mxu0 0.0
    %457 = vmatpush1.msra.mxu0 0.0
    %458 = vmatprep.subr.mxu0 0.0
    %459 = vmatpush1.msra.mxu0 0.0
    %460 = vmatprep.subr.mxu0 0.0
    %461 = vmatpush1.msra.mxu0 0.0
    %462 = vmatprep.subr.mxu0 0.0
    %463 = vmatpush1.msra.mxu0 0.0
    %464 = vmatprep.subr.mxu0 0.0
    %465 = vmatpush1.msra.mxu0 0.0
    %466 = vmatprep.subr.mxu0 0.0
    %467 = vmatpush1.msra.mxu0 0.0
    %468 = vmatprep.subr.mxu0 0.0
    %469 = vmatpush1.msra.mxu0 0.0
    %470 = vmatprep.subr.mxu0 0.0
    %471 = vmatpush1.msra.mxu0 0.0
    %472 = vmatprep.subr.mxu0 0.0
    %473 = vmatpush1.msra.mxu0 0.0
    %474 = vmatprep.subr.mxu0 0.0
    %475 = vmatpush1.msra.mxu0 0.0
    %476 = vmatprep.subr.mxu0 0.0
    %477 = vmatpush1.msra.mxu0 0.0
    %478 = vmatprep.subr.mxu0 0.0
    %479 = vmatpush1.msra.mxu0 0.0
    %480 = vmatprep.subr.mxu0 0.0
    %481 = vmatpush1.msra.mxu0 0.0
    %482 = vmatprep.subr.mxu0 0.0
    %483 = vmatpush1.msra.mxu0 0.0
    %484 = vmatprep.subr.mxu0 0.0
    %485 = vmatpush1.msra.mxu0 0.0
    %486 = vmatprep.subr.mxu0 0.0
    %487 = vmatpush1.msra.mxu0 0.0
    %488 = vmatprep.subr.mxu0 0.0
    %489 = vmatpush1.msra.mxu0 0.0
    %490 = vmatprep.subr.mxu0 0.0
    %491 = vmatpush1.msra.mxu0 0.0
    %492 = vmatprep.subr.mxu0 0.0
    %493 = vmatpush1.msra.mxu0 0.0
    %494 = vmatprep.subr.mxu0 0.0
    %495 = vmatpush1.msra.mxu0 0.0
    %496 = vmatprep.subr.mxu0 0.0
    %497 = vmatpush1.msra.mxu0 0.0
    %498 = vmatprep.subr.mxu0 0.0
    %499 = vmatpush1.msra.mxu0 0.0
    %500 = vmatprep.subr.mxu0 0.0
    %501 = vmatpush1.msra.mxu0 0.0
    %502 = vmatprep.subr.mxu0 0.0
    %503 = vmatpush1.msra.mxu0 0.0
    %504 = vmatprep.mubr.f32.mxu0 0.0
    %505 = vmatmul.mubr.f32.gmra.mrb[0].mxu0 %v438
    %v506 = vpop.f32.mrb[0].mxu0
    %v507 = vadd.f32 0.0, %v506
    %v508 = vpop.f32.mrb[0].mxu0
    %509 = vdwg.mxu0
    %510 = vrot.lane.b32.xlu0 %v177, 120
    %v511 = vpop.permute.xlu0 %510
    %512 = vrot.lane.b32.xlu0 %v169, 88
    %v513 = vpop.permute.xlu0 %512
    %v514 = vsel %vm182, %v511, 0
    %v516 = vsel %vm182, %v513, 0
    %518 = vmatprep.subr.mxu0 0.0
    %519 = vmatpush1.xpose.msra.mxu0 %v516
    %520 = vmatprep.subr.mxu0 0.0
    %521 = vmatpush1.xpose.msra.mxu0 0.0
    %522 = vmatprep.subr.mxu0 0.0
    %523 = vmatpush1.xpose.msra.mxu0 0.0
    %524 = vmatprep.subr.mxu0 0.0
    %525 = vmatpush1.xpose.msra.mxu0 0.0
    %526 = vmatprep.subr.mxu0 0.0
    %527 = vmatpush1.xpose.msra.mxu0 0.0
    %528 = vmatprep.subr.mxu0 0.0
    %529 = vmatpush1.xpose.msra.mxu0 0.0
    %530 = vmatprep.subr.mxu0 0.0
    %531 = vmatpush1.xpose.msra.mxu0 0.0
    %532 = vmatprep.subr.mxu0 0.0
    %533 = vmatpush1.xpose.msra.mxu0 0.0
    %534 = vmatprep.subr.mxu0 0.0
    %535 = vmatpush1.xpose.msra.mxu0 0.0
    %536 = vmatprep.subr.mxu0 0.0
    %537 = vmatpush1.xpose.msra.mxu0 0.0
    %538 = vmatprep.subr.mxu0 0.0
    %539 = vmatpush1.xpose.msra.mxu0 0.0
    %540 = vmatprep.subr.mxu0 0.0
    %541 = vmatpush1.xpose.msra.mxu0 0.0
    %542 = vmatprep.subr.mxu0 0.0
    %543 = vmatpush1.xpose.msra.mxu0 0.0
    %544 = vmatprep.subr.mxu0 0.0
    %545 = vmatpush1.xpose.msra.mxu0 0.0
    %546 = vmatprep.subr.mxu0 0.0
    %547 = vmatpush1.xpose.msra.mxu0 0.0
    %548 = vmatprep.subr.mxu0 0.0
    %549 = vmatpush1.xpose.msra.mxu0 0.0
    %550 = vmatprep.subr.mxu0 0.0
    %551 = vmatpush1.xpose.msra.mxu0 0.0
    %552 = vmatprep.subr.mxu0 0.0
    %553 = vmatpush1.xpose.msra.mxu0 0.0
    %554 = vmatprep.subr.mxu0 0.0
    %555 = vmatpush1.xpose.msra.mxu0 0.0
    %556 = vmatprep.subr.mxu0 0.0
    %557 = vmatpush1.xpose.msra.mxu0 0.0
    %558 = vmatprep.subr.mxu0 0.0
    %559 = vmatpush1.xpose.msra.mxu0 0.0
    %560 = vmatprep.subr.mxu0 0.0
    %561 = vmatpush1.xpose.msra.mxu0 0.0
    %562 = vmatprep.subr.mxu0 0.0
    %563 = vmatpush1.xpose.msra.mxu0 0.0
    %564 = vmatprep.subr.mxu0 0.0
    %565 = vmatpush1.xpose.msra.mxu0 0.0
    %566 = vmatprep.subr.mxu0 0.0
    %567 = vmatpush1.xpose.msra.mxu0 0.0
    %568 = vmatprep.subr.mxu0 0.0
    %569 = vmatpush1.xpose.msra.mxu0 0.0
    %570 = vmatprep.subr.mxu0 0.0
    %571 = vmatpush1.xpose.msra.mxu0 0.0
    %572 = vmatprep.subr.mxu0 0.0
    %573 = vmatpush1.xpose.msra.mxu0 0.0
    %574 = vmatprep.subr.mxu0 0.0
    %575 = vmatpush1.xpose.msra.mxu0 0.0
    %576 = vmatprep.subr.mxu0 0.0
    %577 = vmatpush1.xpose.msra.mxu0 0.0
    %578 = vmatprep.subr.mxu0 0.0
    %579 = vmatpush1.xpose.msra.mxu0 0.0
    %580 = vmatprep.subr.mxu0 0.0
    %581 = vmatpush1.xpose.msra.mxu0 0.0
    %582 = vmatprep.mubr.f32.mxu0 0.0
    %583 = vmatmul.mubr.f32.gmra.mrb[0].mxu0 %v514
    %v584 = vpop.f32.mrb[0].mxu0
    %v585 = vadd.f32 0.0, %v584
    %v586 = vpop.f32.mrb[0].mxu0
    %587 = vdwg.mxu0
    %588 = vrot.lane.b32.xlu0 %v178, 120
    %v589 = vpop.permute.xlu0 %588
    %590 = vrot.lane.b32.xlu0 %v174, 88
    %v591 = vpop.permute.xlu0 %590
    %v592 = vsel %vm182, %v589, 0
    %v594 = vsel %vm182, %v591, 0
    %596 = vmatprep.subr.mxu0 0.0
    %597 = vmatpush1.xpose.msra.mxu0 %v594
    %598 = vmatprep.subr.mxu0 0.0
    %599 = vmatpush1.xpose.msra.mxu0 0.0
    %600 = vmatprep.subr.mxu0 0.0
    %601 = vmatpush1.xpose.msra.mxu0 0.0
    %602 = vmatprep.subr.mxu0 0.0
    %603 = vmatpush1.xpose.msra.mxu0 0.0
    %604 = vmatprep.subr.mxu0 0.0
    %605 = vmatpush1.xpose.msra.mxu0 0.0
    %606 = vmatprep.subr.mxu0 0.0
    %607 = vmatpush1.xpose.msra.mxu0 0.0
    %608 = vmatprep.subr.mxu0 0.0
    %609 = vmatpush1.xpose.msra.mxu0 0.0
    %610 = vmatprep.subr.mxu0 0.0
    %611 = vmatpush1.xpose.msra.mxu0 0.0
    %612 = vmatprep.subr.mxu0 0.0
    %613 = vmatpush1.xpose.msra.mxu0 0.0
    %614 = vmatprep.subr.mxu0 0.0
    %615 = vmatpush1.xpose.msra.mxu0 0.0
    %616 = vmatprep.subr.mxu0 0.0
    %617 = vmatpush1.xpose.msra.mxu0 0.0
    %618 = vmatprep.subr.mxu0 0.0
    %619 = vmatpush1.xpose.msra.mxu0 0.0
    %620 = vmatprep.subr.mxu0 0.0
    %621 = vmatpush1.xpose.msra.mxu0 0.0
    %622 = vmatprep.subr.mxu0 0.0
    %623 = vmatpush1.xpose.msra.mxu0 0.0
    %624 = vmatprep.subr.mxu0 0.0
    %625 = vmatpush1.xpose.msra.mxu0 0.0
    %626 = vmatprep.subr.mxu0 0.0
    %627 = vmatpush1.xpose.msra.mxu0 0.0
    %628 = vmatprep.subr.mxu0 0.0
    %629 = vmatpush1.xpose.msra.mxu0 0.0
    %630 = vmatprep.subr.mxu0 0.0
    %631 = vmatpush1.xpose.msra.mxu0 0.0
    %632 = vmatprep.subr.mxu0 0.0
    %633 = vmatpush1.xpose.msra.mxu0 0.0
    %634 = vmatprep.subr.mxu0 0.0
    %635 = vmatpush1.xpose.msra.mxu0 0.0
    %636 = vmatprep.subr.mxu0 0.0
    %637 = vmatpush1.xpose.msra.mxu0 0.0
    %638 = vmatprep.subr.mxu0 0.0
    %639 = vmatpush1.xpose.msra.mxu0 0.0
    %640 = vmatprep.subr.mxu0 0.0
    %641 = vmatpush1.xpose.msra.mxu0 0.0
    %642 = vmatprep.subr.mxu0 0.0
    %643 = vmatpush1.xpose.msra.mxu0 0.0
    %644 = vmatprep.subr.mxu0 0.0
    %645 = vmatpush1.xpose.msra.mxu0 0.0
    %646 = vmatprep.subr.mxu0 0.0
    %647 = vmatpush1.xpose.msra.mxu0 0.0
    %648 = vmatprep.subr.mxu0 0.0
    %649 = vmatpush1.xpose.msra.mxu0 0.0
    %650 = vmatprep.subr.mxu0 0.0
    %651 = vmatpush1.xpose.msra.mxu0 0.0
    %652 = vmatprep.subr.mxu0 0.0
    %653 = vmatpush1.xpose.msra.mxu0 0.0
    %654 = vmatprep.subr.mxu0 0.0
    %655 = vmatpush1.xpose.msra.mxu0 0.0
    %656 = vmatprep.subr.mxu0 0.0
    %657 = vmatpush1.xpose.msra.mxu0 0.0
    %658 = vmatprep.subr.mxu0 0.0
    %659 = vmatpush1.xpose.msra.mxu0 0.0
    %660 = vmatprep.mubr.f32.mxu0 0.0
    %661 = vmatmul.mubr.f32.gmra.mrb[0].mxu0 %v592
    %v662 = vpop.f32.mrb[0].mxu0
    %v663 = vadd.f32 0.0, %v662
    %v664 = vpop.f32.mrb[0].mxu0
    %665 = vdwg.mxu0
    %v666 = vsel %vm182, %v585, -inf
    %667 = vmax.xlane.f32.xlu0 %v666
    %v668 = vpop.xlane.xlu0 %667
    %v669 = vsel %vm182, %v663, -inf
    %670 = vmax.xlane.f32.xlu0 %v669
    %v671 = vpop.xlane.xlu0 %670
    %v672 = vsub.f32 %v585, %v668
    %v673 = vsub.f32 %v663, %v671
    %v674 = vmul.f32 %v672, 1.442695
    %v675 = vpow.pop %v674
    %v676 = vmul.f32 %v673, 1.442695
    %v677 = vpow.pop %v676
    %v678 = vsel %vm182, %v675, 0.0
    %679 = vadd.xlane.f32.xlu0 %v678
    %v680 = vpop.xlane.xlu0 %679
    %v681 = vsel %vm182, %v677, 0.0
    %682 = vadd.xlane.f32.xlu0 %v681
    %v683 = vpop.xlane.xlu0 %682
    %v684 = vrcp.pop %v680
    %v685 = vrcp.pop %v683
    %v686 = vmul.f32 %v675, %v684
    %v687 = vmul.f32 %v677, %v685
    %688 = vrot.lane.b32.xlu0 %v169, 56
    %v689 = vpop.permute.xlu0 %688
    %v692 = vsel %vm182, %v686, 0
    %694 = vmatprep.subr.mxu0 0.0
    %695 = vmatpush1.msra.mxu0 %v689
    %696 = vmatprep.subr.mxu0 0.0
    %697 = vmatpush1.msra.mxu0 0.0
    %698 = vmatprep.subr.mxu0 0.0
    %699 = vmatpush1.msra.mxu0 0.0
    %700 = vmatprep.subr.mxu0 0.0
    %701 = vmatpush1.msra.mxu0 0.0
    %702 = vmatprep.subr.mxu0 0.0
    %703 = vmatpush1.msra.mxu0 0.0
    %704 = vmatprep.subr.mxu0 0.0
    %705 = vmatpush1.msra.mxu0 0.0
    %706 = vmatprep.subr.mxu0 0.0
    %707 = vmatpush1.msra.mxu0 0.0
    %708 = vmatprep.subr.mxu0 0.0
    %709 = vmatpush1.msra.mxu0 0.0
    %710 = vmatprep.subr.mxu0 0.0
    %711 = vmatpush1.msra.mxu0 0.0
    %712 = vmatprep.subr.mxu0 0.0
    %713 = vmatpush1.msra.mxu0 0.0
    %714 = vmatprep.subr.mxu0 0.0
    %715 = vmatpush1.msra.mxu0 0.0
    %716 = vmatprep.subr.mxu0 0.0
    %717 = vmatpush1.msra.mxu0 0.0
    %718 = vmatprep.subr.mxu0 0.0
    %719 = vmatpush1.msra.mxu0 0.0
    %720 = vmatprep.subr.mxu0 0.0
    %721 = vmatpush1.msra.mxu0 0.0
    %722 = vmatprep.subr.mxu0 0.0
    %723 = vmatpush1.msra.mxu0 0.0
    %724 = vmatprep.subr.mxu0 0.0
    %725 = vmatpush1.msra.mxu0 0.0
    %726 = vmatprep.subr.mxu0 0.0
    %727 = vmatpush1.msra.mxu0 0.0
    %728 = vmatprep.subr.mxu0 0.0
    %729 = vmatpush1.msra.mxu0 0.0
    %730 = vmatprep.subr.mxu0 0.0
    %731 = vmatpush1.msra.mxu0 0.0
    %732 = vmatprep.subr.mxu0 0.0
    %733 = vmatpush1.msra.mxu0 0.0
    %734 = vmatprep.subr.mxu0 0.0
    %735 = vmatpush1.msra.mxu0 0.0
    %736 = vmatprep.subr.mxu0 0.0
    %737 = vmatpush1.msra.mxu0 0.0
    %738 = vmatprep.subr.mxu0 0.0
    %739 = vmatpush1.msra.mxu0 0.0
    %740 = vmatprep.subr.mxu0 0.0
    %741 = vmatpush1.msra.mxu0 0.0
    %742 = vmatprep.subr.mxu0 0.0
    %743 = vmatpush1.msra.mxu0 0.0
    %744 = vmatprep.subr.mxu0 0.0
    %745 = vmatpush1.msra.mxu0 0.0
    %746 = vmatprep.subr.mxu0 0.0
    %747 = vmatpush1.msra.mxu0 0.0
    %748 = vmatprep.subr.mxu0 0.0
    %749 = vmatpush1.msra.mxu0 0.0
    %750 = vmatprep.subr.mxu0 0.0
    %751 = vmatpush1.msra.mxu0 0.0
    %752 = vmatprep.subr.mxu0 0.0
    %753 = vmatpush1.msra.mxu0 0.0
    %754 = vmatprep.subr.mxu0 0.0
    %755 = vmatpush1.msra.mxu0 0.0
    %756 = vmatprep.subr.mxu0 0.0
    %757 = vmatpush1.msra.mxu0 0.0
    %758 = vmatprep.mubr.f32.mxu0 0.0
    %759 = vmatmul.mubr.f32.gmra.mrb[0].mxu0 %v692
    %v760 = vpop.f32.mrb[0].mxu0
    %v761 = vadd.f32 0.0, %v760
    %v762 = vpop.f32.mrb[0].mxu0
    %763 = vdwg.mxu0
    %764 = vrot.lane.b32.xlu0 %v174, 56
    %v765 = vpop.permute.xlu0 %764
    %v768 = vsel %vm182, %v687, 0
    %770 = vmatprep.subr.mxu0 0.0
    %771 = vmatpush1.msra.mxu0 %v765
    %772 = vmatprep.subr.mxu0 0.0
    %773 = vmatpush1.msra.mxu0 0.0
    %774 = vmatprep.subr.mxu0 0.0
    %775 = vmatpush1.msra.mxu0 0.0
    %776 = vmatprep.subr.mxu0 0.0
    %777 = vmatpush1.msra.mxu0 0.0
    %778 = vmatprep.subr.mxu0 0.0
    %779 = vmatpush1.msra.mxu0 0.0
    %780 = vmatprep.subr.mxu0 0.0
    %781 = vmatpush1.msra.mxu0 0.0
    %782 = vmatprep.subr.mxu0 0.0
    %783 = vmatpush1.msra.mxu0 0.0
    %784 = vmatprep.subr.mxu0 0.0
    %785 = vmatpush1.msra.mxu0 0.0
    %786 = vmatprep.subr.mxu0 0.0
    %787 = vmatpush1.msra.mxu0 0.0
    %788 = vmatprep.subr.mxu0 0.0
    %789 = vmatpush1.msra.mxu0 0.0
    %790 = vmatprep.subr.mxu0 0.0
    %791 = vmatpush1.msra.mxu0 0.0
    %792 = vmatprep.subr.mxu0 0.0
    %793 = vmatpush1.msra.mxu0 0.0
    %794 = vmatprep.subr.mxu0 0.0
    %795 = vmatpush1.msra.mxu0 0.0
    %796 = vmatprep.subr.mxu0 0.0
    %797 = vmatpush1.msra.mxu0 0.0
    %798 = vmatprep.subr.mxu0 0.0
    %799 = vmatpush1.msra.mxu0 0.0
    %800 = vmatprep.subr.mxu0 0.0
    %801 = vmatpush1.msra.mxu0 0.0
    %802 = vmatprep.subr.mxu0 0.0
    %803 = vmatpush1.msra.mxu0 0.0
    %804 = vmatprep.subr.mxu0 0.0
    %805 = vmatpush1.msra.mxu0 0.0
    %806 = vmatprep.subr.mxu0 0.0
    %807 = vmatpush1.msra.mxu0 0.0
    %808 = vmatprep.subr.mxu0 0.0
    %809 = vmatpush1.msra.mxu0 0.0
    %810 = vmatprep.subr.mxu0 0.0
    %811 = vmatpush1.msra.mxu0 0.0
    %812 = vmatprep.subr.mxu0 0.0
    %813 = vmatpush1.msra.mxu0 0.0
    %814 = vmatprep.subr.mxu0 0.0
    %815 = vmatpush1.msra.mxu0 0.0
    %816 = vmatprep.subr.mxu0 0.0
    %817 = vmatpush1.msra.mxu0 0.0
    %818 = vmatprep.subr.mxu0 0.0
    %819 = vmatpush1.msra.mxu0 0.0
    %820 = vmatprep.subr.mxu0 0.0
    %821 = vmatpush1.msra.mxu0 0.0
    %822 = vmatprep.subr.mxu0 0.0
    %823 = vmatpush1.msra.mxu0 0.0
    %824 = vmatprep.subr.mxu0 0.0
    %825 = vmatpush1.msra.mxu0 0.0
    %826 = vmatprep.subr.mxu0 0.0
    %827 = vmatpush1.msra.mxu0 0.0
    %828 = vmatprep.subr.mxu0 0.0
    %829 = vmatpush1.msra.mxu0 0.0
    %830 = vmatprep.subr.mxu0 0.0
    %831 = vmatpush1.msra.mxu0 0.0
    %832 = vmatprep.subr.mxu0 0.0
    %833 = vmatpush1.msra.mxu0 0.0
    %834 = vmatprep.mubr.f32.mxu0 0.0
    %835 = vmatmul.mubr.f32.gmra.mrb[0].mxu0 %v768
    %v836 = vpop.f32.mrb[0].mxu0
    %v837 = vadd.f32 0.0, %v836
    %v838 = vpop.f32.mrb[0].mxu0
    %839 = vdwg.mxu0
    %840 = vrot.lane.b32.xlu0 %v177, 112
    %v841 = vpop.permute.xlu0 %840
    %842 = vrot.lane.b32.xlu0 %v169, 80
    %v843 = vpop.permute.xlu0 %842
    %v844 = vsel %vm182, %v841, 0
    %v846 = vsel %vm182, %v843, 0
    %848 = vmatprep.subr.mxu0 0.0
    %849 = vmatpush1.xpose.msra.mxu0 %v846
    %850 = vmatprep.subr.mxu0 0.0
    %851 = vmatpush1.xpose.msra.mxu0 0.0
    %852 = vmatprep.subr.mxu0 0.0
    %853 = vmatpush1.xpose.msra.mxu0 0.0
    %854 = vmatprep.subr.mxu0 0.0
    %855 = vmatpush1.xpose.msra.mxu0 0.0
    %856 = vmatprep.subr.mxu0 0.0
    %857 = vmatpush1.xpose.msra.mxu0 0.0
    %858 = vmatprep.subr.mxu0 0.0
    %859 = vmatpush1.xpose.msra.mxu0 0.0
    %860 = vmatprep.subr.mxu0 0.0
    %861 = vmatpush1.xpose.msra.mxu0 0.0
    %862 = vmatprep.subr.mxu0 0.0
    %863 = vmatpush1.xpose.msra.mxu0 0.0
    %864 = vmatprep.subr.mxu0 0.0
    %865 = vmatpush1.xpose.msra.mxu0 0.0
    %866 = vmatprep.subr.mxu0 0.0
    %867 = vmatpush1.xpose.msra.mxu0 0.0
    %868 = vmatprep.subr.mxu0 0.0
    %869 = vmatpush1.xpose.msra.mxu0 0.0
    %870 = vmatprep.subr.mxu0 0.0
    %871 = vmatpush1.xpose.msra.mxu0 0.0
    %872 = vmatprep.subr.mxu0 0.0
    %873 = vmatpush1.xpose.msra.mxu0 0.0
    %874 = vmatprep.subr.mxu0 0.0
    %875 = vmatpush1.xpose.msra.mxu0 0.0
    %876 = vmatprep.subr.mxu0 0.0
    %877 = vmatpush1.xpose.msra.mxu0 0.0
    %878 = vmatprep.subr.mxu0 0.0
    %879 = vmatpush1.xpose.msra.mxu0 0.0
    %880 = vmatprep.subr.mxu0 0.0
    %881 = vmatpush1.xpose.msra.mxu0 0.0
    %882 = vmatprep.subr.mxu0 0.0
    %883 = vmatpush1.xpose.msra.mxu0 0.0
    %884 = vmatprep.subr.mxu0 0.0
    %885 = vmatpush1.xpose.msra.mxu0 0.0
    %886 = vmatprep.subr.mxu0 0.0
    %887 = vmatpush1.xpose.msra.mxu0 0.0
    %888 = vmatprep.subr.mxu0 0.0
    %889 = vmatpush1.xpose.msra.mxu0 0.0
    %890 = vmatprep.subr.mxu0 0.0
    %891 = vmatpush1.xpose.msra.mxu0 0.0
    %892 = vmatprep.subr.mxu0 0.0
    %893 = vmatpush1.xpose.msra.mxu0 0.0
    %894 = vmatprep.subr.mxu0 0.0
    %895 = vmatpush1.xpose.msra.mxu0 0.0
    %896 = vmatprep.subr.mxu0 0.0
    %897 = vmatpush1.xpose.msra.mxu0 0.0
    %898 = vmatprep.subr.mxu0 0.0
    %899 = vmatpush1.xpose.msra.mxu0 0.0
    %900 = vmatprep.subr.mxu0 0.0
    %901 = vmatpush1.xpose.msra.mxu0 0.0
    %902 = vmatprep.subr.mxu0 0.0
    %903 = vmatpush1.xpose.msra.mxu0 0.0
    %904 = vmatprep.subr.mxu0 0.0
    %905 = vmatpush1.xpose.msra.mxu0 0.0
    %906 = vmatprep.subr.mxu0 0.0
    %907 = vmatpush1.xpose.msra.mxu0 0.0
    %908 = vmatprep.subr.mxu0 0.0
    %909 = vmatpush1.xpose.msra.mxu0 0.0
    %910 = vmatprep.subr.mxu0 0.0
    %911 = vmatpush1.xpose.msra.mxu0 0.0
    %912 = vmatprep.mubr.f32.mxu0 0.0
    %913 = vmatmul.mubr.f32.gmra.mrb[0].mxu0 %v844
    %v914 = vpop.f32.mrb[0].mxu0
    %v915 = vadd.f32 0.0, %v914
    %v916 = vpop.f32.mrb[0].mxu0
    %917 = vdwg.mxu0
    %918 = vrot.lane.b32.xlu0 %v178, 112
    %v919 = vpop.permute.xlu0 %918
    %920 = vrot.lane.b32.xlu0 %v174, 80
    %v921 = vpop.permute.xlu0 %920
    %v922 = vsel %vm182, %v919, 0
    %v924 = vsel %vm182, %v921, 0
    %926 = vmatprep.subr.mxu0 0.0
    %927 = vmatpush1.xpose.msra.mxu0 %v924
    %928 = vmatprep.subr.mxu0 0.0
    %929 = vmatpush1.xpose.msra.mxu0 0.0
    %930 = vmatprep.subr.mxu0 0.0
    %931 = vmatpush1.xpose.msra.mxu0 0.0
    %932 = vmatprep.subr.mxu0 0.0
    %933 = vmatpush1.xpose.msra.mxu0 0.0
    %934 = vmatprep.subr.mxu0 0.0
    %935 = vmatpush1.xpose.msra.mxu0 0.0
    %936 = vmatprep.subr.mxu0 0.0
    %937 = vmatpush1.xpose.msra.mxu0 0.0
    %938 = vmatprep.subr.mxu0 0.0
    %939 = vmatpush1.xpose.msra.mxu0 0.0
    %940 = vmatprep.subr.mxu0 0.0
    %941 = vmatpush1.xpose.msra.mxu0 0.0
    %942 = vmatprep.subr.mxu0 0.0
    %943 = vmatpush1.xpose.msra.mxu0 0.0
    %944 = vmatprep.subr.mxu0 0.0
    %945 = vmatpush1.xpose.msra.mxu0 0.0
    %946 = vmatprep.subr.mxu0 0.0
    %947 = vmatpush1.xpose.msra.mxu0 0.0
    %948 = vmatprep.subr.mxu0 0.0
    %949 = vmatpush1.xpose.msra.mxu0 0.0
    %950 = vmatprep.subr.mxu0 0.0
    %951 = vmatpush1.xpose.msra.mxu0 0.0
    %952 = vmatprep.subr.mxu0 0.0
    %953 = vmatpush1.xpose.msra.mxu0 0.0
    %954 = vmatprep.subr.mxu0 0.0
    %955 = vmatpush1.xpose.msra.mxu0 0.0
    %956 = vmatprep.subr.mxu0 0.0
    %957 = vmatpush1.xpose.msra.mxu0 0.0
    %958 = vmatprep.subr.mxu0 0.0
    %959 = vmatpush1.xpose.msra.mxu0 0.0
    %960 = vmatprep.subr.mxu0 0.0
    %961 = vmatpush1.xpose.msra.mxu0 0.0
    %962 = vmatprep.subr.mxu0 0.0
    %963 = vmatpush1.xpose.msra.mxu0 0.0
    %964 = vmatprep.subr.mxu0 0.0
    %965 = vmatpush1.xpose.msra.mxu0 0.0
    %966 = vmatprep.subr.mxu0 0.0
    %967 = vmatpush1.xpose.msra.mxu0 0.0
    %968 = vmatprep.subr.mxu0 0.0
    %969 = vmatpush1.xpose.msra.mxu0 0.0
    %970 = vmatprep.subr.mxu0 0.0
    %971 = vmatpush1.xpose.msra.mxu0 0.0
    %972 = vmatprep.subr.mxu0 0.0
    %973 = vmatpush1.xpose.msra.mxu0 0.0
    %974 = vmatprep.subr.mxu0 0.0
    %975 = vmatpush1.xpose.msra.mxu0 0.0
    %976 = vmatprep.subr.mxu0 0.0
    %977 = vmatpush1.xpose.msra.mxu0 0.0
    %978 = vmatprep.subr.mxu0 0.0
    %979 = vmatpush1.xpose.msra.mxu0 0.0
    %980 = vmatprep.subr.mxu0 0.0
    %981 = vmatpush1.xpose.msra.mxu0 0.0
    %982 = vmatprep.subr.mxu0 0.0
    %983 = vmatpush1.xpose.msra.mxu0 0.0
    %984 = vmatprep.subr.mxu0 0.0
    %985 = vmatpush1.xpose.msra.mxu0 0.0
    %986 = vmatprep.subr.mxu0 0.0
    %987 = vmatpush1.xpose.msra.mxu0 0.0
    %988 = vmatprep.subr.mxu0 0.0
    %989 = vmatpush1.xpose.msra.mxu0 0.0
    %990 = vmatprep.mubr.f32.mxu0 0.0
    %991 = vmatmul.mubr.f32.gmra.mrb[0].mxu0 %v922
    %v992 = vpop.f32.mrb[0].mxu0
    %v993 = vadd.f32 0.0, %v992
    %v994 = vpop.f32.mrb[0].mxu0
    %995 = vdwg.mxu0
    %v996 = vsel %vm182, %v915, -inf
    %997 = vmax.xlane.f32.xlu0 %v996
    %v998 = vpop.xlane.xlu0 %997
    %v999 = vsel %vm182, %v993, -inf
    %1000 = vmax.xlane.f32.xlu0 %v999
    %v1001 = vpop.xlane.xlu0 %1000
    %v1002 = vsub.f32 %v915, %v998
    %v1003 = vsub.f32 %v993, %v1001
    %v1004 = vmul.f32 %v1002, 1.442695
    %v1005 = vpow.pop %v1004
    %v1006 = vmul.f32 %v1003, 1.442695
    %v1007 = vpow.pop %v1006
    %v1008 = vsel %vm182, %v1005, 0.0
    %1009 = vadd.xlane.f32.xlu0 %v1008
    %v1010 = vpop.xlane.xlu0 %1009
    %v1011 = vsel %vm182, %v1007, 0.0
    %1012 = vadd.xlane.f32.xlu0 %v1011
    %v1013 = vpop.xlane.xlu0 %1012
    %v1014 = vrcp.pop %v1010
    %v1015 = vrcp.pop %v1013
    %v1016 = vmul.f32 %v1005, %v1014
    %v1017 = vmul.f32 %v1007, %v1015
    %1018 = vrot.lane.b32.xlu0 %v169, 48
    %v1019 = vpop.permute.xlu0 %1018
    %v1022 = vsel %vm182, %v1016, 0
    %1024 = vmatprep.subr.mxu0 0.0
    %1025 = vmatpush1.msra.mxu0 %v1019
    %1026 = vmatprep.subr.mxu0 0.0
    %1027 = vmatpush1.msra.mxu0 0.0
    %1028 = vmatprep.subr.mxu0 0.0
    %1029 = vmatpush1.msra.mxu0 0.0
    %1030 = vmatprep.subr.mxu0 0.0
    %1031 = vmatpush1.msra.mxu0 0.0
    %1032 = vmatprep.subr.mxu0 0.0
    %1033 = vmatpush1.msra.mxu0 0.0
    %1034 = vmatprep.subr.mxu0 0.0
    %1035 = vmatpush1.msra.mxu0 0.0
    %1036 = vmatprep.subr.mxu0 0.0
    %1037 = vmatpush1.msra.mxu0 0.0
    %1038 = vmatprep.subr.mxu0 0.0
    %1039 = vmatpush1.msra.mxu0 0.0
    %1040 = vmatprep.subr.mxu0 0.0
    %1041 = vmatpush1.msra.mxu0 0.0
    %1042 = vmatprep.subr.mxu0 0.0
    %1043 = vmatpush1.msra.mxu0 0.0
    %1044 = vmatprep.subr.mxu0 0.0
    %1045 = vmatpush1.msra.mxu0 0.0
    %1046 = vmatprep.subr.mxu0 0.0
    %1047 = vmatpush1.msra.mxu0 0.0
    %1048 = vmatprep.subr.mxu0 0.0
    %1049 = vmatpush1.msra.mxu0 0.0
    %1050 = vmatprep.subr.mxu0 0.0
    %1051 = vmatpush1.msra.mxu0 0.0
    %1052 = vmatprep.subr.mxu0 0.0
    %1053 = vmatpush1.msra.mxu0 0.0
    %1054 = vmatprep.subr.mxu0 0.0
    %1055 = vmatpush1.msra.mxu0 0.0
    %1056 = vmatprep.subr.mxu0 0.0
    %1057 = vmatpush1.msra.mxu0 0.0
    %1058 = vmatprep.subr.mxu0 0.0
    %1059 = vmatpush1.msra.mxu0 0.0
    %1060 = vmatprep.subr.mxu0 0.0
    %1061 = vmatpush1.msra.mxu0 0.0
    %1062 = vmatprep.subr.mxu0 0.0
    %1063 = vmatpush1.msra.mxu0 0.0
    %1064 = vmatprep.subr.mxu0 0.0
    %1065 = vmatpush1.msra.mxu0 0.0
    %1066 = vmatprep.subr.mxu0 0.0
    %1067 = vmatpush1.msra.mxu0 0.0
    %1068 = vmatprep.subr.mxu0 0.0
    %1069 = vmatpush1.msra.mxu0 0.0
    %1070 = vmatprep.subr.mxu0 0.0
    %1071 = vmatpush1.msra.mxu0 0.0
    %1072 = vmatprep.subr.mxu0 0.0
    %1073 = vmatpush1.msra.mxu0 0.0
    %1074 = vmatprep.subr.mxu0 0.0
    %1075 = vmatpush1.msra.mxu0 0.0
    %1076 = vmatprep.subr.mxu0 0.0
    %1077 = vmatpush1.msra.mxu0 0.0
    %1078 = vmatprep.subr.mxu0 0.0
    %1079 = vmatpush1.msra.mxu0 0.0
    %1080 = vmatprep.subr.mxu0 0.0
    %1081 = vmatpush1.msra.mxu0 0.0
    %1082 = vmatprep.subr.mxu0 0.0
    %1083 = vmatpush1.msra.mxu0 0.0
    %1084 = vmatprep.subr.mxu0 0.0
    %1085 = vmatpush1.msra.mxu0 0.0
    %1086 = vmatprep.subr.mxu0 0.0
    %1087 = vmatpush1.msra.mxu0 0.0
    %1088 = vmatprep.mubr.f32.mxu0 0.0
    %1089 = vmatmul.mubr.f32.gmra.mrb[0].mxu0 %v1022
    %v1090 = vpop.f32.mrb[0].mxu0
    %v1091 = vadd.f32 0.0, %v1090
    %v1092 = vpop.f32.mrb[0].mxu0
    %1093 = vdwg.mxu0
    %1094 = vrot.lane.b32.xlu0 %v174, 48
    %v1095 = vpop.permute.xlu0 %1094
    %v1098 = vsel %vm182, %v1017, 0
    %1100 = vmatprep.subr.mxu0 0.0
    %1101 = vmatpush1.msra.mxu0 %v1095
    %1102 = vmatprep.subr.mxu0 0.0
    %1103 = vmatpush1.msra.mxu0 0.0
    %1104 = vmatprep.subr.mxu0 0.0
    %1105 = vmatpush1.msra.mxu0 0.0
    %1106 = vmatprep.subr.mxu0 0.0
    %1107 = vmatpush1.msra.mxu0 0.0
    %1108 = vmatprep.subr.mxu0 0.0
    %1109 = vmatpush1.msra.mxu0 0.0
    %1110 = vmatprep.subr.mxu0 0.0
    %1111 = vmatpush1.msra.mxu0 0.0
    %1112 = vmatprep.subr.mxu0 0.0
    %1113 = vmatpush1.msra.mxu0 0.0
    %1114 = vmatprep.subr.mxu0 0.0
    %1115 = vmatpush1.msra.mxu0 0.0
    %1116 = vmatprep.subr.mxu0 0.0
    %1117 = vmatpush1.msra.mxu0 0.0
    %1118 = vmatprep.subr.mxu0 0.0
    %1119 = vmatpush1.msra.mxu0 0.0
    %1120 = vmatprep.subr.mxu0 0.0
    %1121 = vmatpush1.msra.mxu0 0.0
    %1122 = vmatprep.subr.mxu0 0.0
    %1123 = vmatpush1.msra.mxu0 0.0
    %1124 = vmatprep.subr.mxu0 0.0
    %1125 = vmatpush1.msra.mxu0 0.0
    %1126 = vmatprep.subr.mxu0 0.0
    %1127 = vmatpush1.msra.mxu0 0.0
    %1128 = vmatprep.subr.mxu0 0.0
    %1129 = vmatpush1.msra.mxu0 0.0
    %1130 = vmatprep.subr.mxu0 0.0
    %1131 = vmatpush1.msra.mxu0 0.0
    %1132 = vmatprep.subr.mxu0 0.0
    %1133 = vmatpush1.msra.mxu0 0.0
    %1134 = vmatprep.subr.mxu0 0.0
    %1135 = vmatpush1.msra.mxu0 0.0
    %1136 = vmatprep.subr.mxu0 0.0
    %1137 = vmatpush1.msra.mxu0 0.0
    %1138 = vmatprep.subr.mxu0 0.0
    %1139 = vmatpush1.msra.mxu0 0.0
    %1140 = vmatprep.subr.mxu0 0.0
    %1141 = vmatpush1.msra.mxu0 0.0
    %1142 = vmatprep.subr.mxu0 0.0
    %1143 = vmatpush1.msra.mxu0 0.0
    %1144 = vmatprep.subr.mxu0 0.0
    %1145 = vmatpush1.msra.mxu0 0.0
    %1146 = vmatprep.subr.mxu0 0.0
    %1147 = vmatpush1.msra.mxu0 0.0
    %1148 = vmatprep.subr.mxu0 0.0
    %1149 = vmatpush1.msra.mxu0 0.0
    %1150 = vmatprep.subr.mxu0 0.0
    %1151 = vmatpush1.msra.mxu0 0.0
    %1152 = vmatprep.subr.mxu0 0.0
    %1153 = vmatpush1.msra.mxu0 0.0
    %1154 = vmatprep.subr.mxu0 0.0
    %1155 = vmatpush1.msra.mxu0 0.0
    %1156 = vmatprep.subr.mxu0 0.0
    %1157 = vmatpush1.msra.mxu0 0.0
    %1158 = vmatprep.subr.mxu0 0.0
    %1159 = vmatpush1.msra.mxu0 0.0
    %1160 = vmatprep.subr.mxu0 0.0
    %1161 = vmatpush1.msra.mxu0 0.0
    %1162 = vmatprep.subr.mxu0 0.0
    %1163 = vmatpush1.msra.mxu0 0.0
    %1164 = vmatprep.mubr.f32.mxu0 0.0
    %1165 = vmatmul.mubr.f32.gmra.mrb[0].mxu0 %v1098
    %v1166 = vpop.f32.mrb[0].mxu0
    %v1167 = vadd.f32 0.0, %v1166
    %v1168 = vpop.f32.mrb[0].mxu0
    %1169 = vdwg.mxu0
    %1170 = vrot.lane.b32.xlu0 %v177, 104
    %v1171 = vpop.permute.xlu0 %1170
    %1172 = vrot.lane.b32.xlu0 %v169, 72
    %v1173 = vpop.permute.xlu0 %1172
    %v1174 = vsel %vm182, %v1171, 0
    %v1176 = vsel %vm182, %v1173, 0
    %1178 = vmatprep.subr.mxu0 0.0
    %1179 = vmatpush1.xpose.msra.mxu0 %v1176
    %1180 = vmatprep.subr.mxu0 0.0
    %1181 = vmatpush1.xpose.msra.mxu0 0.0
    %1182 = vmatprep.subr.mxu0 0.0
    %1183 = vmatpush1.xpose.msra.mxu0 0.0
    %1184 = vmatprep.subr.mxu0 0.0
    %1185 = vmatpush1.xpose.msra.mxu0 0.0
    %1186 = vmatprep.subr.mxu0 0.0
    %1187 = vmatpush1.xpose.msra.mxu0 0.0
    %1188 = vmatprep.subr.mxu0 0.0
    %1189 = vmatpush1.xpose.msra.mxu0 0.0
    %1190 = vmatprep.subr.mxu0 0.0
    %1191 = vmatpush1.xpose.msra.mxu0 0.0
    %1192 = vmatprep.subr.mxu0 0.0
    %1193 = vmatpush1.xpose.msra.mxu0 0.0
    %1194 = vmatprep.subr.mxu0 0.0
    %1195 = vmatpush1.xpose.msra.mxu0 0.0
    %1196 = vmatprep.subr.mxu0 0.0
    %1197 = vmatpush1.xpose.msra.mxu0 0.0
    %1198 = vmatprep.subr.mxu0 0.0
    %1199 = vmatpush1.xpose.msra.mxu0 0.0
    %1200 = vmatprep.subr.mxu0 0.0
    %1201 = vmatpush1.xpose.msra.mxu0 0.0
    %1202 = vmatprep.subr.mxu0 0.0
    %1203 = vmatpush1.xpose.msra.mxu0 0.0
    %1204 = vmatprep.subr.mxu0 0.0
    %1205 = vmatpush1.xpose.msra.mxu0 0.0
    %1206 = vmatprep.subr.mxu0 0.0
    %1207 = vmatpush1.xpose.msra.mxu0 0.0
    %1208 = vmatprep.subr.mxu0 0.0
    %1209 = vmatpush1.xpose.msra.mxu0 0.0
    %1210 = vmatprep.subr.mxu0 0.0
    %1211 = vmatpush1.xpose.msra.mxu0 0.0
    %1212 = vmatprep.subr.mxu0 0.0
    %1213 = vmatpush1.xpose.msra.mxu0 0.0
    %1214 = vmatprep.subr.mxu0 0.0
    %1215 = vmatpush1.xpose.msra.mxu0 0.0
    %1216 = vmatprep.subr.mxu0 0.0
    %1217 = vmatpush1.xpose.msra.mxu0 0.0
    %1218 = vmatprep.subr.mxu0 0.0
    %1219 = vmatpush1.xpose.msra.mxu0 0.0
    %1220 = vmatprep.subr.mxu0 0.0
    %1221 = vmatpush1.xpose.msra.mxu0 0.0
    %1222 = vmatprep.subr.mxu0 0.0
    %1223 = vmatpush1.xpose.msra.mxu0 0.0
    %1224 = vmatprep.subr.mxu0 0.0
    %1225 = vmatpush1.xpose.msra.mxu0 0.0
    %1226 = vmatprep.subr.mxu0 0.0
    %1227 = vmatpush1.xpose.msra.mxu0 0.0
    %1228 = vmatprep.subr.mxu0 0.0
    %1229 = vmatpush1.xpose.msra.mxu0 0.0
    %1230 = vmatprep.subr.mxu0 0.0
    %1231 = vmatpush1.xpose.msra.mxu0 0.0
    %1232 = vmatprep.subr.mxu0 0.0
    %1233 = vmatpush1.xpose.msra.mxu0 0.0
    %1234 = vmatprep.subr.mxu0 0.0
    %1235 = vmatpush1.xpose.msra.mxu0 0.0
    %1236 = vmatprep.subr.mxu0 0.0
    %1237 = vmatpush1.xpose.msra.mxu0 0.0
    %1238 = vmatprep.subr.mxu0 0.0
    %1239 = vmatpush1.xpose.msra.mxu0 0.0
    %1240 = vmatprep.subr.mxu0 0.0
    %1241 = vmatpush1.xpose.msra.mxu0 0.0
    %1242 = vmatprep.mubr.f32.mxu0 0.0
    %1243 = vmatmul.mubr.f32.gmra.mrb[0].mxu0 %v1174
    %v1244 = vpop.f32.mrb[0].mxu0
    %v1245 = vadd.f32 0.0, %v1244
    %v1246 = vpop.f32.mrb[0].mxu0
    %1247 = vdwg.mxu0
    %1248 = vrot.lane.b32.xlu0 %v178, 104
    %v1249 = vpop.permute.xlu0 %1248
    %1250 = vrot.lane.b32.xlu0 %v174, 72
    %v1251 = vpop.permute.xlu0 %1250
    %v1252 = vsel %vm182, %v1249, 0
    %v1254 = vsel %vm182, %v1251, 0
    %1256 = vmatprep.subr.mxu0 0.0
    %1257 = vmatpush1.xpose.msra.mxu0 %v1254
    %1258 = vmatprep.subr.mxu0 0.0
    %1259 = vmatpush1.xpose.msra.mxu0 0.0
    %1260 = vmatprep.subr.mxu0 0.0
    %1261 = vmatpush1.xpose.msra.mxu0 0.0
    %1262 = vmatprep.subr.mxu0 0.0
    %1263 = vmatpush1.xpose.msra.mxu0 0.0
    %1264 = vmatprep.subr.mxu0 0.0
    %1265 = vmatpush1.xpose.msra.mxu0 0.0
    %1266 = vmatprep.subr.mxu0 0.0
    %1267 = vmatpush1.xpose.msra.mxu0 0.0
    %1268 = vmatprep.subr.mxu0 0.0
    %1269 = vmatpush1.xpose.msra.mxu0 0.0
    %1270 = vmatprep.subr.mxu0 0.0
    %1271 = vmatpush1.xpose.msra.mxu0 0.0
    %1272 = vmatprep.subr.mxu0 0.0
    %1273 = vmatpush1.xpose.msra.mxu0 0.0
    %1274 = vmatprep.subr.mxu0 0.0
    %1275 = vmatpush1.xpose.msra.mxu0 0.0
    %1276 = vmatprep.subr.mxu0 0.0
    %1277 = vmatpush1.xpose.msra.mxu0 0.0
    %1278 = vmatprep.subr.mxu0 0.0
    %1279 = vmatpush1.xpose.msra.mxu0 0.0
    %1280 = vmatprep.subr.mxu0 0.0
    %1281 = vmatpush1.xpose.msra.mxu0 0.0
    %1282 = vmatprep.subr.mxu0 0.0
    %1283 = vmatpush1.xpose.msra.mxu0 0.0
    %1284 = vmatprep.subr.mxu0 0.0
    %1285 = vmatpush1.xpose.msra.mxu0 0.0
    %1286 = vmatprep.subr.mxu0 0.0
    %1287 = vmatpush1.xpose.msra.mxu0 0.0
    %1288 = vmatprep.subr.mxu0 0.0
    %1289 = vmatpush1.xpose.msra.mxu0 0.0
    %1290 = vmatprep.subr.mxu0 0.0
    %1291 = vmatpush1.xpose.msra.mxu0 0.0
    %1292 = vmatprep.subr.mxu0 0.0
    %1293 = vmatpush1.xpose.msra.mxu0 0.0
    %1294 = vmatprep.subr.mxu0 0.0
    %1295 = vmatpush1.xpose.msra.mxu0 0.0
    %1296 = vmatprep.subr.mxu0 0.0
    %1297 = vmatpush1.xpose.msra.mxu0 0.0
    %1298 = vmatprep.subr.mxu0 0.0
    %1299 = vmatpush1.xpose.msra.mxu0 0.0
    %1300 = vmatprep.subr.mxu0 0.0
    %1301 = vmatpush1.xpose.msra.mxu0 0.0
    %1302 = vmatprep.subr.mxu0 0.0
    %1303 = vmatpush1.xpose.msra.mxu0 0.0
    %1304 = vmatprep.subr.mxu0 0.0
    %1305 = vmatpush1.xpose.msra.mxu0 0.0
    %1306 = vmatprep.subr.mxu0 0.0
    %1307 = vmatpush1.xpose.msra.mxu0 0.0
    %1308 = vmatprep.subr.mxu0 0.0
    %1309 = vmatpush1.xpose.msra.mxu0 0.0
    %1310 = vmatprep.subr.mxu0 0.0
    %1311 = vmatpush1.xpose.msra.mxu0 0.0
    %1312 = vmatprep.subr.mxu0 0.0
    %1313 = vmatpush1.xpose.msra.mxu0 0.0
    %1314 = vmatprep.subr.mxu0 0.0
    %1315 = vmatpush1.xpose.msra.mxu0 0.0
    %1316 = vmatprep.subr.mxu0 0.0
    %1317 = vmatpush1.xpose.msra.mxu0 0.0
    %1318 = vmatprep.subr.mxu0 0.0
    %1319 = vmatpush1.xpose.msra.mxu0 0.0
    %1320 = vmatprep.mubr.f32.mxu0 0.0
    %1321 = vmatmul.mubr.f32.gmra.mrb[0].mxu0 %v1252
    %v1322 = vpop.f32.mrb[0].mxu0
    %v1323 = vadd.f32 0.0, %v1322
    %v1324 = vpop.f32.mrb[0].mxu0
    %1325 = vdwg.mxu0
    %v1326 = vsel %vm182, %v1245, -inf
    %1327 = vmax.xlane.f32.xlu0 %v1326
    %v1328 = vpop.xlane.xlu0 %1327
    %v1329 = vsel %vm182, %v1323, -inf
    %1330 = vmax.xlane.f32.xlu0 %v1329
    %v1331 = vpop.xlane.xlu0 %1330
    %v1332 = vsub.f32 %v1245, %v1328
    %v1333 = vsub.f32 %v1323, %v1331
    %v1334 = vmul.f32 %v1332, 1.442695
    %v1335 = vpow.pop %v1334
    %v1336 = vmul.f32 %v1333, 1.442695
    %v1337 = vpow.pop %v1336
    %v1338 = vsel %vm182, %v1335, 0.0
    %1339 = vadd.xlane.f32.xlu0 %v1338
    %v1340 = vpop.xlane.xlu0 %1339
    %v1341 = vsel %vm182, %v1337, 0.0
    %1342 = vadd.xlane.f32.xlu0 %v1341
    %v1343 = vpop.xlane.xlu0 %1342
    %v1344 = vrcp.pop %v1340
    %v1345 = vrcp.pop %v1343
    %v1346 = vmul.f32 %v1335, %v1344
    %v1347 = vmul.f32 %v1337, %v1345
    %1348 = vrot.lane.b32.xlu0 %v169, 40
    %v1349 = vpop.permute.xlu0 %1348
    %v1352 = vsel %vm182, %v1346, 0
    %1354 = vmatprep.subr.mxu0 0.0
    %1355 = vmatpush1.msra.mxu0 %v1349
    %1356 = vmatprep.subr.mxu0 0.0
    %1357 = vmatpush1.msra.mxu0 0.0
    %1358 = vmatprep.subr.mxu0 0.0
    %1359 = vmatpush1.msra.mxu0 0.0
    %1360 = vmatprep.subr.mxu0 0.0
    %1361 = vmatpush1.msra.mxu0 0.0
    %1362 = vmatprep.subr.mxu0 0.0
    %1363 = vmatpush1.msra.mxu0 0.0
    %1364 = vmatprep.subr.mxu0 0.0
    %1365 = vmatpush1.msra.mxu0 0.0
    %1366 = vmatprep.subr.mxu0 0.0
    %1367 = vmatpush1.msra.mxu0 0.0
    %1368 = vmatprep.subr.mxu0 0.0
    %1369 = vmatpush1.msra.mxu0 0.0
    %1370 = vmatprep.subr.mxu0 0.0
    %1371 = vmatpush1.msra.mxu0 0.0
    %1372 = vmatprep.subr.mxu0 0.0
    %1373 = vmatpush1.msra.mxu0 0.0
    %1374 = vmatprep.subr.mxu0 0.0
    %1375 = vmatpush1.msra.mxu0 0.0
    %1376 = vmatprep.subr.mxu0 0.0
    %1377 = vmatpush1.msra.mxu0 0.0
    %1378 = vmatprep.subr.mxu0 0.0
    %1379 = vmatpush1.msra.mxu0 0.0
    %1380 = vmatprep.subr.mxu0 0.0
    %1381 = vmatpush1.msra.mxu0 0.0
    %1382 = vmatprep.subr.mxu0 0.0
    %1383 = vmatpush1.msra.mxu0 0.0
    %1384 = vmatprep.subr.mxu0 0.0
    %1385 = vmatpush1.msra.mxu0 0.0
    %1386 = vmatprep.subr.mxu0 0.0
    %1387 = vmatpush1.msra.mxu0 0.0
    %1388 = vmatprep.subr.mxu0 0.0
    %1389 = vmatpush1.msra.mxu0 0.0
    %1390 = vmatprep.subr.mxu0 0.0
    %1391 = vmatpush1.msra.mxu0 0.0
    %1392 = vmatprep.subr.mxu0 0.0
    %1393 = vmatpush1.msra.mxu0 0.0
    %1394 = vmatprep.subr.mxu0 0.0
    %1395 = vmatpush1.msra.mxu0 0.0
    %1396 = vmatprep.subr.mxu0 0.0
    %1397 = vmatpush1.msra.mxu0 0.0
    %1398 = vmatprep.subr.mxu0 0.0
    %1399 = vmatpush1.msra.mxu0 0.0
    %1400 = vmatprep.subr.mxu0 0.0
    %1401 = vmatpush1.msra.mxu0 0.0
    %1402 = vmatprep.subr.mxu0 0.0
    %1403 = vmatpush1.msra.mxu0 0.0
    %1404 = vmatprep.subr.mxu0 0.0
    %1405 = vmatpush1.msra.mxu0 0.0
    %1406 = vmatprep.subr.mxu0 0.0
    %1407 = vmatpush1.msra.mxu0 0.0
    %1408 = vmatprep.subr.mxu0 0.0
    %1409 = vmatpush1.msra.mxu0 0.0
    %1410 = vmatprep.subr.mxu0 0.0
    %1411 = vmatpush1.msra.mxu0 0.0
    %1412 = vmatprep.subr.mxu0 0.0
    %1413 = vmatpush1.msra.mxu0 0.0
    %1414 = vmatprep.subr.mxu0 0.0
    %1415 = vmatpush1.msra.mxu0 0.0
    %1416 = vmatprep.subr.mxu0 0.0
    %1417 = vmatpush1.msra.mxu0 0.0
    %1418 = vmatprep.mubr.f32.mxu0 0.0
    %1419 = vmatmul.mubr.f32.gmra.mrb[0].mxu0 %v1352
    %v1420 = vpop.f32.mrb[0].mxu0
    %v1421 = vadd.f32 0.0, %v1420
    %v1422 = vpop.f32.mrb[0].mxu0
    %1423 = vdwg.mxu0
    %1424 = vrot.lane.b32.xlu0 %v174, 40
    %v1425 = vpop.permute.xlu0 %1424
    %v1428 = vsel %vm182, %v1347, 0
    %1430 = vmatprep.subr.mxu0 0.0
    %1431 = vmatpush1.msra.mxu0 %v1425
    %1432 = vmatprep.subr.mxu0 0.0
    %1433 = vmatpush1.msra.mxu0 0.0
    %1434 = vmatprep.subr.mxu0 0.0
    %1435 = vmatpush1.msra.mxu0 0.0
    %1436 = vmatprep.subr.mxu0 0.0
    %1437 = vmatpush1.msra.mxu0 0.0
    %1438 = vmatprep.subr.mxu0 0.0
    %1439 = vmatpush1.msra.mxu0 0.0
    %1440 = vmatprep.subr.mxu0 0.0
    %1441 = vmatpush1.msra.mxu0 0.0
    %1442 = vmatprep.subr.mxu0 0.0
    %1443 = vmatpush1.msra.mxu0 0.0
    %1444 = vmatprep.subr.mxu0 0.0
    %1445 = vmatpush1.msra.mxu0 0.0
    %1446 = vmatprep.subr.mxu0 0.0
    %1447 = vmatpush1.msra.mxu0 0.0
    %1448 = vmatprep.subr.mxu0 0.0
    %1449 = vmatpush1.msra.mxu0 0.0
    %1450 = vmatprep.subr.mxu0 0.0
    %1451 = vmatpush1.msra.mxu0 0.0
    %1452 = vmatprep.subr.mxu0 0.0
    %1453 = vmatpush1.msra.mxu0 0.0
    %1454 = vmatprep.subr.mxu0 0.0
    %1455 = vmatpush1.msra.mxu0 0.0
    %1456 = vmatprep.subr.mxu0 0.0
    %1457 = vmatpush1.msra.mxu0 0.0
    %1458 = vmatprep.subr.mxu0 0.0
    %1459 = vmatpush1.msra.mxu0 0.0
    %1460 = vmatprep.subr.mxu0 0.0
    %1461 = vmatpush1.msra.mxu0 0.0
    %1462 = vmatprep.subr.mxu0 0.0
    %1463 = vmatpush1.msra.mxu0 0.0
    %1464 = vmatprep.subr.mxu0 0.0
    %1465 = vmatpush1.msra.mxu0 0.0
    %1466 = vmatprep.subr.mxu0 0.0
    %1467 = vmatpush1.msra.mxu0 0.0
    %1468 = vmatprep.subr.mxu0 0.0
    %1469 = vmatpush1.msra.mxu0 0.0
    %1470 = vmatprep.subr.mxu0 0.0
    %1471 = vmatpush1.msra.mxu0 0.0
    %1472 = vmatprep.subr.mxu0 0.0
    %1473 = vmatpush1.msra.mxu0 0.0
    %1474 = vmatprep.subr.mxu0 0.0
    %1475 = vmatpush1.msra.mxu0 0.0
    %1476 = vmatprep.subr.mxu0 0.0
    %1477 = vmatpush1.msra.mxu0 0.0
    %1478 = vmatprep.subr.mxu0 0.0
    %1479 = vmatpush1.msra.mxu0 0.0
    %1480 = vmatprep.subr.mxu0 0.0
    %1481 = vmatpush1.msra.mxu0 0.0
    %1482 = vmatprep.subr.mxu0 0.0
    %1483 = vmatpush1.msra.mxu0 0.0
    %1484 = vmatprep.subr.mxu0 0.0
    %1485 = vmatpush1.msra.mxu0 0.0
    %1486 = vmatprep.subr.mxu0 0.0
    %1487 = vmatpush1.msra.mxu0 0.0
    %1488 = vmatprep.subr.mxu0 0.0
    %1489 = vmatpush1.msra.mxu0 0.0
    %1490 = vmatprep.subr.mxu0 0.0
    %1491 = vmatpush1.msra.mxu0 0.0
    %1492 = vmatprep.subr.mxu0 0.0
    %1493 = vmatpush1.msra.mxu0 0.0
    %1494 = vmatprep.mubr.f32.mxu0 0.0
    %1495 = vmatmul.mubr.f32.gmra.mrb[0].mxu0 %v1428
    %v1496 = vpop.f32.mrb[0].mxu0
    %v1497 = vadd.f32 0.0, %v1496
    %v1498 = vpop.f32.mrb[0].mxu0
    %1499 = vdwg.mxu0
    %1502 = vrot.lane.b32.xlu0 %v761, 8
    %v1503 = vpop.permute.xlu0 %1502
    %1504 = vrot.lane.b32.xlu0 %v837, 8
    %v1505 = vpop.permute.xlu0 %1504
    %1510 = vrot.lane.b32.xlu0 %v1091, 16
    %v1511 = vpop.permute.xlu0 %1510
    %1512 = vrot.lane.b32.xlu0 %v1167, 16
    %v1513 = vpop.permute.xlu0 %1512
    %1518 = vrot.lane.b32.xlu0 %v1421, 24
    %v1519 = vpop.permute.xlu0 %1518
    %1520 = vrot.lane.b32.xlu0 %v1497, 24
    %v1521 = vpop.permute.xlu0 %1520
    %v1524 = vsel %vm182, %v431, %v1503
    %v1525 = vsel %vm182, %v507, %v1505
    %vm1526 = vcmask 130048
    %v1527 = vsel %vm1526, %v1524, %v1511
    %v1528 = vsel %vm1526, %v1525, %v1513
    %vm1529 = vcmask 195584
    %v1530 = vsel %vm1529, %v1527, %v1519
    %v1531 = vsel %vm1529, %v1528, %v1521
    %v1532 = vld [vmem:[%s2] sm:$0xff]
    %v1533 = vld [vmem:[%s2 + $0x8] sm:$0xff]
    %v1534 = vld [vmem:[%s2 + $0x10] sm:$0xff]
    %v1535 = vld [vmem:[%s2 + $0x18] sm:$0xff]
    %v1536 = vlaneseq
    %v1537 = vshrl.u32 %v1536, 7
    %v1538 = vsub.s32 0, %v1537
    %v1539 = vrot.slane %v40, %v1538
    %v1541 = vsel %vm48, %v1530, 0
    %v1544 = vsel %vm48, %v1531, 0
    %1546 = vmatprep.subr.mxu0 0.0
    %1547 = vmatpush1.msra.mxu0 %v1532
    %1548 = vmatprep.subr.mxu0 0.0
    %1549 = vmatpush1.msra.mxu0 %v1533
    %1550 = vmatprep.subr.mxu0 0.0
    %1551 = vmatpush1.msra.mxu0 %v1534
    %1552 = vmatprep.subr.mxu0 0.0
    %1553 = vmatpush1.msra.mxu0 %v1535
    %1554 = vmatprep.subr.mxu0 0.0
    %1555 = vmatpush1.msra.mxu0 0.0
    %1556 = vmatprep.subr.mxu0 0.0
    %1557 = vmatpush1.msra.mxu0 0.0
    %1558 = vmatprep.subr.mxu0 0.0
    %1559 = vmatpush1.msra.mxu0 0.0
    %1560 = vmatprep.subr.mxu0 0.0
    %1561 = vmatpush1.msra.mxu0 0.0
    %1562 = vmatprep.subr.mxu0 0.0
    %1563 = vmatpush1.msra.mxu0 0.0
    %1564 = vmatprep.subr.mxu0 0.0
    %1565 = vmatpush1.msra.mxu0 0.0
    %1566 = vmatprep.subr.mxu0 0.0
    %1567 = vmatpush1.msra.mxu0 0.0
    %1568 = vmatprep.subr.mxu0 0.0
    %1569 = vmatpush1.msra.mxu0 0.0
    %1570 = vmatprep.subr.mxu0 0.0
    %1571 = vmatpush1.msra.mxu0 0.0
    %1572 = vmatprep.subr.mxu0 0.0
    %1573 = vmatpush1.msra.mxu0 0.0
    %1574 = vmatprep.subr.mxu0 0.0
    %1575 = vmatpush1.msra.mxu0 0.0
    %1576 = vmatprep.subr.mxu0 0.0
    %1577 = vmatpush1.msra.mxu0 0.0
    %1578 = vmatprep.subr.mxu0 0.0
    %1579 = vmatpush1.msra.mxu0 0.0
    %1580 = vmatprep.subr.mxu0 0.0
    %1581 = vmatpush1.msra.mxu0 0.0
    %1582 = vmatprep.subr.mxu0 0.0
    %1583 = vmatpush1.msra.mxu0 0.0
    %1584 = vmatprep.subr.mxu0 0.0
    %1585 = vmatpush1.msra.mxu0 0.0
    %1586 = vmatprep.subr.mxu0 0.0
    %1587 = vmatpush1.msra.mxu0 0.0
    %1588 = vmatprep.subr.mxu0 0.0
    %1589 = vmatpush1.msra.mxu0 0.0
    %1590 = vmatprep.subr.mxu0 0.0
    %1591 = vmatpush1.msra.mxu0 0.0
    %1592 = vmatprep.subr.mxu0 0.0
    %1593 = vmatpush1.msra.mxu0 0.0
    %1594 = vmatprep.subr.mxu0 0.0
    %1595 = vmatpush1.msra.mxu0 0.0
    %1596 = vmatprep.subr.mxu0 0.0
    %1597 = vmatpush1.msra.mxu0 0.0
    %1598 = vmatprep.subr.mxu0 0.0
    %1599 = vmatpush1.msra.mxu0 0.0
    %1600 = vmatprep.subr.mxu0 0.0
    %1601 = vmatpush1.msra.mxu0 0.0
    %1602 = vmatprep.subr.mxu0 0.0
    %1603 = vmatpush1.msra.mxu0 0.0
    %1604 = vmatprep.subr.mxu0 0.0
    %1605 = vmatpush1.msra.mxu0 0.0
    %1606 = vmatprep.subr.mxu0 0.0
    %1607 = vmatpush1.msra.mxu0 0.0
    %1608 = vmatprep.subr.mxu0 0.0
    %1609 = vmatpush1.msra.mxu0 0.0
    %1610 = vmatprep.mubr.f32.mxu0 0.0
    %1611 = vmatmul.mubr.f32.gmra.mrb[0].mxu0 %v1541
    %v1612 = vpop.f32.mrb[0].mxu0
    %v1613 = vadd.f32 %v1539, %v1612
    %v1614 = vpop.f32.mrb[0].mxu0
    %1615 = vmatprep.mubr.f32.mxu0 0.0
    %1616 = vmatmul.mubr.f32.gmra.mrb[0].mxu0 %v1544
    %v1617 = vpop.f32.mrb[0].mxu0
    %v1618 = vadd.f32 %v1539, %v1617
    %v1619 = vpop.f32.mrb[0].mxu0
    %1620 = vdwg.mxu0
    %v1621 = vadd.f32 %v46, %v1613
    %v1622 = vadd.f32 %v47, %v1618
    %v1623 = vsel %vm48, %v1621, 0.0
    %1624 = vadd.xlane.f32.xlu0 %v1623
    %v1625 = vpop.xlane.xlu0 %1624
    %v1626 = vsel %vm48, %v1622, 0.0
    %1627 = vadd.xlane.f32.xlu0 %v1626
    %v1628 = vpop.xlane.xlu0 %1627
    %v1629 = vmul.f32 %v1625, %v55
    %v1630 = vmul.f32 %v1628, %v55
    %v1631 = vsub.f32 %v1621, %v1629
    %v1632 = vsub.f32 %v1622, %v1630
    %v1633 = vmul.f32 %v1631, %v1631
    %v1634 = vmul.f32 %v1632, %v1632
    %v1635 = vsel %vm48, %v1633, 0.0
    %1636 = vadd.xlane.f32.xlu0 %v1635
    %v1637 = vpop.xlane.xlu0 %1636
    %v1638 = vsel %vm48, %v1634, 0.0
    %1639 = vadd.xlane.f32.xlu0 %v1638
    %v1640 = vpop.xlane.xlu0 %1639
    %v1641 = vmul.f32 %v1637, %v55
    %v1642 = vmul.f32 %v1640, %v55
    %v1643 = vadd.f32 %v1641, 1e-05
    %v1644 = vadd.f32 %v1642, 1e-05
    %v1645 = vrsqrt.pop %v1643
    %v1646 = vrsqrt.pop %v1644
    %v1647 = vmul.f32 %v1631, %v1645
    %v1648 = vmul.f32 %v1632, %v1646
    %v1649 = vlaneseq
    %v1650 = vshrl.u32 %v1649, 7
    %v1651 = vsub.s32 0, %v1650
    %v1652 = vrot.slane %v41, %v1651
    %v1653 = vmul.f32 %v1647, %v1652
    %v1654 = vmul.f32 %v1648, %v1652
    %v1655 = vlaneseq
    %v1656 = vshrl.u32 %v1655, 7
    %v1657 = vsub.s32 0, %v1656
    %v1658 = vrot.slane %v42, %v1657
    %v1659 = vadd.f32 %v1653, %v1658
    %v1660 = vadd.f32 %v1654, %v1658
    %v1661 = vld [vmem:[%s3] sm:$0xff]
    %v1662 = vld [vmem:[%s3 + $0x8] sm:$0xff]
    %v1663 = vld [vmem:[%s3 + $0x10] sm:$0xff]
    %v1664 = vld [vmem:[%s3 + $0x18] sm:$0xff]
    %v1665 = vlaneseq
    %v1666 = vshrl.u32 %v1665, 7
    %v1667 = vsub.s32 0, %v1666
    %v1668 = vrot.slane %v45, %v1667
    %v1670 = vsel %vm48, %v1659, 0
    %v1673 = vsel %vm48, %v1660, 0
    %1675 = vmatprep.subr.mxu0 0.0
    %1676 = vmatpush1.msra.mxu0 %v1661
    %1677 = vmatprep.subr.mxu0 0.0
    %1678 = vmatpush1.msra.mxu0 %v1662
    %1679 = vmatprep.subr.mxu0 0.0
    %1680 = vmatpush1.msra.mxu0 %v1663
    %1681 = vmatprep.subr.mxu0 0.0
    %1682 = vmatpush1.msra.mxu0 %v1664
    %1683 = vmatprep.subr.mxu0 0.0
    %1684 = vmatpush1.msra.mxu0 0.0
    %1685 = vmatprep.subr.mxu0 0.0
    %1686 = vmatpush1.msra.mxu0 0.0
    %1687 = vmatprep.subr.mxu0 0.0
    %1688 = vmatpush1.msra.mxu0 0.0
    %1689 = vmatprep.subr.mxu0 0.0
    %1690 = vmatpush1.msra.mxu0 0.0
    %1691 = vmatprep.subr.mxu0 0.0
    %1692 = vmatpush1.msra.mxu0 0.0
    %1693 = vmatprep.subr.mxu0 0.0
    %1694 = vmatpush1.msra.mxu0 0.0
    %1695 = vmatprep.subr.mxu0 0.0
    %1696 = vmatpush1.msra.mxu0 0.0
    %1697 = vmatprep.subr.mxu0 0.0
    %1698 = vmatpush1.msra.mxu0 0.0
    %1699 = vmatprep.subr.mxu0 0.0
    %1700 = vmatpush1.msra.mxu0 0.0
    %1701 = vmatprep.subr.mxu0 0.0
    %1702 = vmatpush1.msra.mxu0 0.0
    %1703 = vmatprep.subr.mxu0 0.0
    %1704 = vmatpush1.msra.mxu0 0.0
    %1705 = vmatprep.subr.mxu0 0.0
    %1706 = vmatpush1.msra.mxu0 0.0
    %1707 = vmatprep.subr.mxu0 0.0
    %1708 = vmatpush1.msra.mxu0 0.0
    %1709 = vmatprep.subr.mxu0 0.0
    %1710 = vmatpush1.msra.mxu0 0.0
    %1711 = vmatprep.subr.mxu0 0.0
    %1712 = vmatpush1.msra.mxu0 0.0
    %1713 = vmatprep.subr.mxu0 0.0
    %1714 = vmatpush1.msra.mxu0 0.0
    %1715 = vmatprep.subr.mxu0 0.0
    %1716 = vmatpush1.msra.mxu0 0.0
    %1717 = vmatprep.subr.mxu0 0.0
    %1718 = vmatpush1.msra.mxu0 0.0
    %1719 = vmatprep.subr.mxu0 0.0
    %1720 = vmatpush1.msra.mxu0 0.0
    %1721 = vmatprep.subr.mxu0 0.0
    %1722 = vmatpush1.msra.mxu0 0.0
    %1723 = vmatprep.subr.mxu0 0.0
    %1724 = vmatpush1.msra.mxu0 0.0
    %1725 = vmatprep.subr.mxu0 0.0
    %1726 = vmatpush1.msra.mxu0 0.0
    %1727 = vmatprep.subr.mxu0 0.0
    %1728 = vmatpush1.msra.mxu0 0.0
    %1729 = vmatprep.subr.mxu0 0.0
    %1730 = vmatpush1.msra.mxu0 0.0
    %1731 = vmatprep.subr.mxu0 0.0
    %1732 = vmatpush1.msra.mxu0 0.0
    %1733 = vmatprep.subr.mxu0 0.0
    %1734 = vmatpush1.msra.mxu0 0.0
    %1735 = vmatprep.subr.mxu0 0.0
    %1736 = vmatpush1.msra.mxu0 0.0
    %1737 = vmatprep.subr.mxu0 0.0
    %1738 = vmatpush1.msra.mxu0 0.0
    %1739 = vmatprep.mubr.f32.mxu0 0.0
    %1740 = vmatmul.mubr.f32.gmra.mrb[0].mxu0 %v1670
    %v1741 = vpop.f32.mrb[0].mxu0
    %v1742 = vadd.f32 %v1668, %v1741
    %v1743 = vpop.f32.mrb[0].mxu0
    %1744 = vmatprep.mubr.f32.mxu0 0.0
    %1745 = vmatmul.mubr.f32.gmra.mrb[0].mxu0 %v1673
    %v1746 = vpop.f32.mrb[0].mxu0
    %v1747 = vadd.f32 %v1668, %v1746
    %v1748 = vpop.f32.mrb[0].mxu0
    %1749 = vdwg.mxu0
    %v1750 = vmul.f32 %v1742, 0.5
    %v1751 = vmul.f32 %v1747, 0.5
    %v1752 = vrcp.pop 1.4142135
    %v1753 = vmul.f32 %v1742, %v1752
    %v1754 = vmul.f32 %v1747, %v1752
    %v1755 = verf.f32.pop %v1753
    %v1756 = verf.f32.pop %v1754
    %v1757 = vadd.f32 %v1755, 1.0
    %v1758 = vadd.f32 %v1756, 1.0
    %v1759 = vmul.f32 %v1750, %v1757
    %v1760 = vmul.f32 %v1751, %v1758
    %v1761 = vld [vmem:[%s4] sm:$0xff]
    %v1762 = vld [vmem:[%s4 + $0x8] sm:$0xff]
    %v1763 = vld [vmem:[%s4 + $0x10] sm:$0xff]
    %v1764 = vld [vmem:[%s4 + $0x18] sm:$0xff]
    %v1765 = vld [vmem:[%s4 + $0x20] sm:$0xff]
    %v1766 = vld [vmem:[%s4 + $0x28] sm:$0xff]
    %v1767 = vld [vmem:[%s4 + $0x30] sm:$0xff]
    %v1768 = vld [vmem:[%s4 + $0x38] sm:$0xff]
    %v1769 = vlaneseq
    %v1770 = vshrl.u32 %v1769, 7
    %v1771 = vsub.s32 0, %v1770
    %v1772 = vrot.slane %v43, %v1771
    %vm1773 = vcmask 523264
    %v1775 = vsel %vm1773, %v1759, 0
    %v1778 = vsel %vm1773, %v1760, 0
    %1780 = vmatprep.subr.mxu0 0.0
    %1781 = vmatpush1.msra.mxu0 %v1761
    %1782 = vmatprep.subr.mxu0 0.0
    %1783 = vmatpush1.msra.mxu0 %v1762
    %1784 = vmatprep.subr.mxu0 0.0
    %1785 = vmatpush1.msra.mxu0 %v1763
    %1786 = vmatprep.subr.mxu0 0.0
    %1787 = vmatpush1.msra.mxu0 %v1764
    %1788 = vmatprep.subr.mxu0 0.0
    %1789 = vmatpush1.msra.mxu0 %v1765
    %1790 = vmatprep.subr.mxu0 0.0
    %1791 = vmatpush1.msra.mxu0 %v1766
    %1792 = vmatprep.subr.mxu0 0.0
    %1793 = vmatpush1.msra.mxu0 %v1767
    %1794 = vmatprep.subr.mxu0 0.0
    %1795 = vmatpush1.msra.mxu0 %v1768
    %1796 = vmatprep.subr.mxu0 0.0
    %1797 = vmatpush1.msra.mxu0 0.0
    %1798 = vmatprep.subr.mxu0 0.0
    %1799 = vmatpush1.msra.mxu0 0.0
    %1800 = vmatprep.subr.mxu0 0.0
    %1801 = vmatpush1.msra.mxu0 0.0
    %1802 = vmatprep.subr.mxu0 0.0
    %1803 = vmatpush1.msra.mxu0 0.0
    %1804 = vmatprep.subr.mxu0 0.0
    %1805 = vmatpush1.msra.mxu0 0.0
    %1806 = vmatprep.subr.mxu0 0.0
    %1807 = vmatpush1.msra.mxu0 0.0
    %1808 = vmatprep.subr.mxu0 0.0
    %1809 = vmatpush1.msra.mxu0 0.0
    %1810 = vmatprep.subr.mxu0 0.0
    %1811 = vmatpush1.msra.mxu0 0.0
    %1812 = vmatprep.subr.mxu0 0.0
    %1813 = vmatpush1.msra.mxu0 0.0
    %1814 = vmatprep.subr.mxu0 0.0
    %1815 = vmatpush1.msra.mxu0 0.0
    %1816 = vmatprep.subr.mxu0 0.0
    %1817 = vmatpush1.msra.mxu0 0.0
    %1818 = vmatprep.subr.mxu0 0.0
    %1819 = vmatpush1.msra.mxu0 0.0
    %1820 = vmatprep.subr.mxu0 0.0
    %1821 = vmatpush1.msra.mxu0 0.0
    %1822 = vmatprep.subr.mxu0 0.0
    %1823 = vmatpush1.msra.mxu0 0.0
    %1824 = vmatprep.subr.mxu0 0.0
    %1825 = vmatpush1.msra.mxu0 0.0
    %1826 = vmatprep.subr.mxu0 0.0
    %1827 = vmatpush1.msra.mxu0 0.0
    %1828 = vmatprep.subr.mxu0 0.0
    %1829 = vmatpush1.msra.mxu0 0.0
    %1830 = vmatprep.subr.mxu0 0.0
    %1831 = vmatpush1.msra.mxu0 0.0
    %1832 = vmatprep.subr.mxu0 0.0
    %1833 = vmatpush1.msra.mxu0 0.0
    %1834 = vmatprep.subr.mxu0 0.0
    %1835 = vmatpush1.msra.mxu0 0.0
    %1836 = vmatprep.subr.mxu0 0.0
    %1837 = vmatpush1.msra.mxu0 0.0
    %1838 = vmatprep.subr.mxu0 0.0
    %1839 = vmatpush1.msra.mxu0 0.0
    %1840 = vmatprep.subr.mxu0 0.0
    %1841 = vmatpush1.msra.mxu0 0.0
    %1842 = vmatprep.subr.mxu0 0.0
    %1843 = vmatpush1.msra.mxu0 0.0
    %1844 = vmatprep.mubr.f32.mxu0 0.0
    %1845 = vmatmul.mubr.f32.gmra.mrb[0].mxu0 %v1775
    %v1846 = vpop.f32.mrb[0].mxu0
    %v1847 = vadd.f32 %v1772, %v1846
    %v1848 = vpop.f32.mrb[0].mxu0
    %1849 = vmatprep.mubr.f32.mxu0 0.0
    %1850 = vmatmul.mubr.f32.gmra.mrb[0].mxu0 %v1778
    %v1851 = vpop.f32.mrb[0].mxu0
    %v1852 = vadd.f32 %v1772, %v1851
    %v1853 = vpop.f32.mrb[0].mxu0
    %1854 = vdwg.mxu0
    %v1855 = vadd.f32 %v1621, %v1847
    %v1856 = vadd.f32 %v1622, %v1852
    %1857 = vst.msk [vmem:[#allocation5] sm:$0xff] %vm48, %v1855
    %1858 = vst.msk [vmem:[#allocation5 + $0x8] sm:$0xff] %vm48, %v1856
    // Predicated region
    $region30: #{tpu_custom_call.1} parent=1 // pred_check
      _
    $region31: #{tpu_custom_call.1} parent=1 // pred_check_branch
      %1860 = sbr.rel (0) target = $region33
    $region32: #{tpu_custom_call.1} parent=1 // pred_region
      %s1862 = ssub.s32 256, 256
      %1863 = vsyncadd [#allocation4], %s1862
      %s1864 = sshll.u32 [#allocation5], 4
      %s1865 = int_to_ptr.vmem [resolvable:$true] %s1864
      %1870 = dma.vmem_to_hbm [thread:$0]  %s1865, 256, %s6, [#allocation4], 128, 128, 8
    $region33: #{tpu_custom_call.1} parent=1 // pred_fallthru
      _
    // Predicated region
    $region34: #{tpu_custom_call.1} parent=1 // pred_check
      _
    $region35: #{tpu_custom_call.1} parent=1 // pred_check_branch
      %1872 = sbr.rel (0) target = $region37
    $region36: #{tpu_custom_call.1} parent=1 // pred_region
      %1873 = dma.done [#allocation4], 256
    $region37: #{tpu_custom_call.1} parent=1 // pred_fallthru
      _
    %1874 = vsyncpa [#allocation3], 1
    %1875 = vsyncpa [#allocation4], 1

</llo_original>
